<compile_context>
chip_gen: v7x
topology: tpu7x:2x2x1
jax: 0.10.0
libtpu: 0.0.40
codegen_flags: <defaults>
</compile_context>

<pallas_src>
import math

import jax
import jax.numpy as jnp
from jax import lax
from jax.experimental import pallas as pl
from jax.experimental.pallas import tpu as pltpu


# ----------------------------------------------------------------------------
# Kernel: one (batch, seq-tile) step of the fused Mamba block.
# ----------------------------------------------------------------------------
def mamba_block_kernel(
    x_ref,        # (1, TL, d_model)
    w_in_x_ref,   # (d_model, d_inner)    in_proj, x half (pre-transposed)
    w_in_z_ref,   # (d_model, d_inner)    in_proj, z half
    conv_w_ref,   # (2, d_inner)          depthwise conv taps [t-1, t]
    conv_b_ref,   # (1, d_inner)
    w_xp_ref,     # (d_inner, n_xp_pad)   fused x_proj [dt | B | C | zero pad]
    dtp_w_ref,    # (dt_rank, d_inner)    dt_proj weight (pre-transposed)
    dtp_b_ref,    # (1, d_inner)
    a_t_ref,      # (d_state, d_inner)    A = -exp(A_log), transposed
    d_skip_ref,   # (1, d_inner)          skip D
    w_out_ref,    # (d_inner, d_model)    out_proj (pre-transposed)
    ln_w_ref,     # (1, d_model)
    ln_b_ref,     # (1, d_model)
    out_ref,      # (1, TL, d_model)
    h_sc,         # VMEM (d_state, d_inner)  SSM state, carried across seq tiles
    cc_sc,        # VMEM (1, d_inner)        conv history row, carried
    dlt_sc,       # VMEM (TL, d_inner)       delta
    du_sc,        # VMEM (TL, d_inner)       delta * u
    xp_sc,        # VMEM (TL, n_xp_pad)      fused x_proj output [dt|B|C|pad]
    y_sc,         # VMEM (TL, d_inner)       scan readout
):
  TL = x_ref.shape[1]
  d_inner = w_in_x_ref.shape[1]
  d_state = a_t_ref.shape[0]
  dt_rank = dtp_w_ref.shape[0]
  CH = 8 if TL % 8 == 0 else TL            # scan chunk (static)
  n_chunks = TL // CH
  mm = w_in_x_ref.dtype                    # matmul operand dtype (f32 or bf16)

  # ---- reset per-sequence carries at the first sequence tile ---------------
  @pl.when(pl.program_id(1) == 0)
  def _():
    h_sc[...] = jnp.zeros_like(h_sc)
    cc_sc[...] = jnp.zeros_like(cc_sc)

  x = x_ref[0].astype(mm)                                       # (TL, d_model)

  # ---- in_proj (no bias): x branch + gate z (MXU) ---------------------------
  xin = jnp.dot(x, w_in_x_ref[...], preferred_element_type=jnp.float32)
  z = jnp.dot(x, w_in_z_ref[...], preferred_element_type=jnp.float32)

  # ---- depthwise causal Conv1d (k=2, padding=1, truncated): ----------------
  #      out[t] = w0 * xin[t-1] + w1 * xin[t] + b,   xin[-1] carried from the
  #      previous sequence tile (zero on the very first tile).
  shifted = pltpu.roll(xin, shift=1, axis=0)
  is_row0 = lax.broadcasted_iota(jnp.int32, (TL, d_inner), 0) == 0
  x_prev = jnp.where(is_row0, cc_sc[...], shifted)
  conv = x_prev * conv_w_ref[0:1, :] + xin * conv_w_ref[1:2, :] + conv_b_ref[...]
  u = conv * jax.nn.sigmoid(conv)                               # SiLU
  cc_sc[...] = xin[TL - 1:TL, :]                                # history for next tile

  # ---- fused x_proj: one lane-dense MXU matmul -> [dt | B | C | pad] -------
  xdbc = jnp.dot(u.astype(mm), w_xp_ref[...],
                 preferred_element_type=jnp.float32)            # (TL, n_xp_pad)
  xp_sc[...] = xdbc

  # ---- delta = softplus(dt_proj(dt)) (MXU) ----------------------------------
  dt = xdbc[:, :dt_rank]
  delta = jax.nn.softplus(
      jnp.dot(dt.astype(mm), dtp_w_ref[...],
              preferred_element_type=jnp.float32) + dtp_b_ref[...])
  dlt_sc[...] = delta
  du_sc[...] = delta * u

  a_t = a_t_ref[...]                                            # (d_state, d_inner)

  # ---- sequential selective scan, fused readout, h carried in registers ----
  def chunk_body(c, h):
    t0 = pl.multiple_of(c * CH, CH)
    d_blk = dlt_sc[pl.ds(t0, CH), :]                            # (CH, d_inner)
    du_blk = du_sc[pl.ds(t0, CH), :]                            # (CH, d_inner)
    blk = xp_sc[pl.ds(t0, CH), :]                               # (CH, n_xp_pad)
    blkT = jnp.transpose(blk)                                   # (n_xp_pad, CH)
    ys = []
    for s in range(CH):                                         # static unroll
      dA = jnp.exp(d_blk[s:s + 1, :] * a_t)                     # (d_state, d_inner)
      b_col = blkT[dt_rank:dt_rank + d_state, s:s + 1]          # (d_state, 1)
      h = dA * h + du_blk[s:s + 1, :] * b_col
      c_row = blk[s:s + 1, dt_rank + d_state:dt_rank + 2 * d_state]
      ys.append(jnp.dot(c_row, h, preferred_element_type=jnp.float32))
    y_sc[pl.ds(t0, CH), :] = jnp.concatenate(ys, axis=0)
    return h

  h_final = lax.fori_loop(0, n_chunks, chunk_body, h_sc[...])
  h_sc[...] = h_final                                           # carry to next tile

  # ---- skip + gate + out_proj + LayerNorm ----------------------------------
  y = y_sc[...] + d_skip_ref[...] * u
  y = y * (z * jax.nn.sigmoid(z))
  o = jnp.dot(y.astype(mm), w_out_ref[...],
              preferred_element_type=jnp.float32)               # (TL, d_model)

  mu = jnp.mean(o, axis=-1, keepdims=True)
  var = jnp.mean(jnp.square(o - mu), axis=-1, keepdims=True)
  o = (o - mu) * lax.rsqrt(var + 1e-5)
  out_ref[0] = (o * ln_w_ref[...] + ln_b_ref[...]).astype(out_ref.dtype)


PARAM_KEYS = ("w_in_x", "w_in_z", "conv_w", "conv_b", "w_xp", "dtp_w", "dtp_b",
              "a_t", "d_skip", "w_out", "ln_w", "ln_b")
MATMUL_KEYS = ("w_in_x", "w_in_z", "w_xp", "dtp_w", "w_out")


def _padded_bytes(shape, dtype):
  s = list(shape)
  s[-1] = max(-(-s[-1] // 128) * 128, 128)
  if len(s) >= 2:
    s[-2] = max(-(-s[-2] // 8) * 8, 8)
  n = 1
  for d in s:
    n *= d
  return n * jnp.dtype(dtype).itemsize


# ----------------------------------------------------------------------------
# Wrapper: grid = (batch, seq_tiles).
# ----------------------------------------------------------------------------
def mamba_block(x, params, *, seq_tile=None, matmul_dtype=jnp.float32):
  B, L, d_model = x.shape
  d_inner = params["w_in_x"].shape[1]
  d_state = params["a_t"].shape[0]

  TL = seq_tile if seq_tile is not None else (L if L <= 128 else 128)
  assert L % TL == 0 and TL % 8 == 0, "seq tile must divide L and be a multiple of 8"

  p = dict(params)
  n_xp = p["w_xp"].shape[1]
  n_xp_pad = -(-n_xp // 128) * 128                    # lane-dense x_proj output
  if n_xp_pad != n_xp:
    p["w_xp"] = jnp.pad(p["w_xp"], ((0, 0), (0, n_xp_pad - n_xp)))
  for k in MATMUL_KEYS:                               # bf16 MXU operands (v6e/v7x)
    p[k] = p[k].astype(matmul_dtype)
  weights = [p[k] for k in PARAM_KEYS]

  in_specs = [pl.BlockSpec((1, TL, d_model), lambda b, l: (b, l, 0))]
  for w in weights:
    in_specs.append(pl.BlockSpec(w.shape, lambda b, l: (0, 0)))
  out_spec = pl.BlockSpec((1, TL, d_model), lambda b, l: (b, l, 0))

  scratch_shapes = [
      pltpu.VMEM((d_state, d_inner), jnp.float32),    # h (carried across tiles)
      pltpu.VMEM((1, d_inner), jnp.float32),          # conv history row
      pltpu.VMEM((TL, d_inner), jnp.float32),         # delta
      pltpu.VMEM((TL, d_inner), jnp.float32),         # delta * u
      pltpu.VMEM((TL, n_xp_pad), jnp.float32),        # [dt | B | C | pad]
      pltpu.VMEM((TL, d_inner), jnp.float32),         # scan readout y
  ]

  # conservative scoped-VMEM budget: double-buffered x/out blocks + weights +
  # scratch, 2x margin, clamped to [32 MiB, 64 MiB] (v7x physical is 64 MiB).
  est = 2 * 2 * _padded_bytes((1, TL, d_model), jnp.float32)
  est += 2 * sum(_padded_bytes(w.shape, w.dtype) for w in weights)
  est += sum(_padded_bytes(s.shape, s.dtype) for s in scratch_shapes)
  vmem_limit = int(min(max(2 * est, 32 * 2**20), 64 * 2**20))

  grid_spec = pltpu.PrefetchScalarGridSpec(
      num_scalar_prefetch=0,
      grid=(B, L // TL),
      in_specs=in_specs,
      out_specs=out_spec,
      scratch_shapes=scratch_shapes,
  )

  return pl.pallas_call(
      mamba_block_kernel,
      out_shape=jax.ShapeDtypeStruct((B, L, d_model), jnp.float32),
      grid_spec=grid_spec,
      compiler_params=pltpu.CompilerParams(
          dimension_semantics=("parallel", "arbitrary"),
          vmem_limit_bytes=vmem_limit),
  )(x, *weights)


# ----------------------------------------------------------------------------
# Deterministic parameter init (Mamba(d_model, d_state=16, d_conv=2, expand=1)).
# ----------------------------------------------------------------------------
def init_params(key, d_model, d_state=16, d_conv=2, expand=1):
  d_inner = expand * d_model
  dt_rank = math.ceil(d_model / 16)
  ks = jax.random.split(key, 7)

  def unif(k, shape, fan_in):
    b = 1.0 / math.sqrt(fan_in)
    return jax.random.uniform(k, shape, jnp.float32, -b, b)

  W_in = unif(ks[0], (2 * d_inner, d_model), d_model)            # in_proj.weight
  conv_w = unif(ks[1], (d_inner, d_conv), d_conv)                # conv1d.weight[:,0,:]
  conv_b = unif(ks[2], (d_inner,), d_conv)                       # conv1d.bias
  W_xp = unif(ks[3], (dt_rank + 2 * d_state, d_inner), d_inner)  # x_proj.weight
  dtp_w = unif(ks[4], (d_inner, dt_rank), dt_rank)               # dt_proj.weight
  u01 = jax.random.uniform(ks[5], (d_inner,), jnp.float32)       # Mamba dt-bias init
  dt0 = jnp.exp(u01 * (math.log(0.1) - math.log(1e-3)) + math.log(1e-3))
  dt0 = jnp.maximum(dt0, 1e-4)
  dtp_b = dt0 + jnp.log(-jnp.expm1(-dt0))                        # dt_proj.bias
  A_log = jnp.log(jnp.tile(jnp.arange(1, d_state + 1, dtype=jnp.float32),
                           (d_inner, 1)))                        # (d_inner, d_state)
  W_out = unif(ks[6], (d_model, d_inner), d_inner)               # out_proj.weight

  return {
      "w_in_x": W_in[:d_inner].T,                 # (d_model, d_inner)
      "w_in_z": W_in[d_inner:].T,                 # (d_model, d_inner)
      "conv_w": conv_w.T,                         # (2, d_inner)
      "conv_b": conv_b[None, :],                  # (1, d_inner)
      "w_xp": W_xp.T,                             # (d_inner, dt_rank + 2*d_state)
      "dtp_w": dtp_w.T,                           # (dt_rank, d_inner)
      "dtp_b": dtp_b[None, :],                    # (1, d_inner)
      "a_t": (-jnp.exp(A_log)).T,                 # (d_state, d_inner)
      "d_skip": jnp.ones((1, d_inner), jnp.float32),
      "w_out": W_out.T,                           # (d_inner, d_model)
      "ln_w": jnp.ones((1, d_model), jnp.float32),
      "ln_b": jnp.zeros((1, d_model), jnp.float32),
  }


# ----------------------------------------------------------------------------
# Pure-JAX reference (same math as the PyTorch slow path).
# ----------------------------------------------------------------------------
def mamba_block_ref(x, p):
  hp = lax.Precision.HIGHEST
  B, L, d_model = x.shape
  d_state = p["a_t"].shape[0]
  dt_rank = p["dtp_w"].shape[0]

  xin = jnp.einsum("bld,de->ble", x, p["w_in_x"], precision=hp)
  z = jnp.einsum("bld,de->ble", x, p["w_in_z"], precision=hp)

  x_prev = jnp.pad(xin, ((0, 0), (1, 0), (0, 0)))[:, :L]
  conv = x_prev * p["conv_w"][0] + xin * p["conv_w"][1] + p["conv_b"][0]
  u = conv * jax.nn.sigmoid(conv)

  xdbc = jnp.einsum("ble,ef->blf", u, p["w_xp"], precision=hp)
  dt = xdbc[..., :dt_rank]
  Bm = xdbc[..., dt_rank:dt_rank + d_state]
  Cm = xdbc[..., dt_rank + d_state:dt_rank + 2 * d_state]
  delta = jax.nn.softplus(
      jnp.einsum("blr,re->ble", dt, p["dtp_w"], precision=hp) + p["dtp_b"][0])

  dA = jnp.exp(delta[:, :, None, :] * p["a_t"][None, None, :, :])
  dBu = (delta * u)[:, :, None, :] * Bm[:, :, :, None]

  def scan_one(dA_b, dBu_b):
    def step(h, inp):
      h = inp[0] * h + inp[1]
      return h, h
    h0 = jnp.zeros(dA_b.shape[1:], jnp.float32)
    _, hs = lax.scan(step, h0, (dA_b, dBu_b))
    return hs

  hs = jax.vmap(scan_one)(dA, dBu)                   # (B, L, d_state, d_inner)
  y = jnp.sum(hs * Cm[:, :, :, None], axis=2) + p["d_skip"][0] * u
  y = y * (z * jax.nn.sigmoid(z))
  o = jnp.einsum("ble,ed->bld", y, p["w_out"], precision=hp)

  mu = o.mean(-1, keepdims=True)
  var = ((o - mu) ** 2).mean(-1, keepdims=True)
  return (o - mu) / jnp.sqrt(var + 1e-5) * p["ln_w"][0] + p["ln_b"][0]


if __name__ == "__main__":
  key = jax.random.PRNGKey(0)
  k_x, k_p = jax.random.split(key)

  batch, seq_len, d_model = 2, 16, 32
  x = jax.random.normal(k_x, (batch, seq_len, d_model), jnp.float32)
  params = init_params(k_p, d_model)

  # seq_tile=8 -> two sequence tiles per batch element, exercising the
  # cross-tile SSM-state and conv-history carries.
  out = mamba_block(x, params, seq_tile=8)
  jax.block_until_ready(out)

  ref = mamba_block_ref(x, params)
  err = float(jnp.max(jnp.abs(out - ref)))
  assert err < 2e-2, f"kernel/ref mismatch: max abs err = {err}"

  # bf16 MXU-operand variant (v6e/v7x optimization); accumulation & scan in f32.
  out_bf16 = mamba_block(x, params, seq_tile=8, matmul_dtype=jnp.bfloat16)
  jax.block_until_ready(out_bf16)
  err_bf16 = float(jnp.max(jnp.abs(out_bf16 - ref)))
  assert err_bf16 < 2.5e-1, f"bf16 variant mismatch: max abs err = {err_bf16}"

  print("KERNEL_OK")
</pallas_src>

<mosaic_0001>
module attributes {stable_mosaic.version = 11 : i64} {
  func.func @mamba_block_kernel(%arg0: i32, %arg1: i32, %arg2: memref<1x8x32xf32, #tpu.memory_space<vmem>>, %arg3: memref<32x32xf32, #tpu.memory_space<vmem>>, %arg4: memref<32x32xf32, #tpu.memory_space<vmem>>, %arg5: memref<2x32xf32, #tpu.memory_space<vmem>>, %arg6: memref<1x32xf32, #tpu.memory_space<vmem>>, %arg7: memref<32x128xf32, #tpu.memory_space<vmem>>, %arg8: memref<2x32xf32, #tpu.memory_space<vmem>>, %arg9: memref<1x32xf32, #tpu.memory_space<vmem>>, %arg10: memref<16x32xf32, #tpu.memory_space<vmem>>, %arg11: memref<1x32xf32, #tpu.memory_space<vmem>>, %arg12: memref<32x32xf32, #tpu.memory_space<vmem>>, %arg13: memref<1x32xf32, #tpu.memory_space<vmem>>, %arg14: memref<1x32xf32, #tpu.memory_space<vmem>>, %arg15: memref<1x8x32xf32, #tpu.memory_space<vmem>>, %arg16: memref<16x32xf32, #tpu.memory_space<vmem>>, %arg17: memref<1x32xf32, #tpu.memory_space<vmem>>, %arg18: memref<8x32xf32, #tpu.memory_space<vmem>>, %arg19: memref<8x32xf32, #tpu.memory_space<vmem>>, %arg20: memref<8x128xf32, #tpu.memory_space<vmem>>, %arg21: memref<8x32xf32, #tpu.memory_space<vmem>>) attributes {dimension_semantics = [#tpu.dimension_semantics<parallel>, #tpu.dimension_semantics<arbitrary>], iteration_bounds = array<i64: 2, 2>, scalar_prefetch = 0 : i64, scratch_operands = 6 : i64, tpu.core_type = #tpu.core_type<tc>, window_params = [{transform_indices = @transform_0, window_bounds = array<i64: 1, 8, 32>}, {pipeline_mode = #tpu.pipeline_mode<synchronous>, transform_indices = @transform_1, window_bounds = array<i64: 32, 32>}, {pipeline_mode = #tpu.pipeline_mode<synchronous>, transform_indices = @transform_2, window_bounds = array<i64: 32, 32>}, {pipeline_mode = #tpu.pipeline_mode<synchronous>, transform_indices = @transform_3, window_bounds = array<i64: 2, 32>}, {pipeline_mode = #tpu.pipeline_mode<synchronous>, transform_indices = @transform_4, window_bounds = array<i64: 1, 32>}, {pipeline_mode = #tpu.pipeline_mode<synchronous>, transform_indices = @transform_5, window_bounds = array<i64: 32, 128>}, {pipeline_mode = #tpu.pipeline_mode<synchronous>, transform_indices = @transform_6, window_bounds = array<i64: 2, 32>}, {pipeline_mode = #tpu.pipeline_mode<synchronous>, transform_indices = @transform_7, window_bounds = array<i64: 1, 32>}, {pipeline_mode = #tpu.pipeline_mode<synchronous>, transform_indices = @transform_8, window_bounds = array<i64: 16, 32>}, {pipeline_mode = #tpu.pipeline_mode<synchronous>, transform_indices = @transform_9, window_bounds = array<i64: 1, 32>}, {pipeline_mode = #tpu.pipeline_mode<synchronous>, transform_indices = @transform_10, window_bounds = array<i64: 32, 32>}, {pipeline_mode = #tpu.pipeline_mode<synchronous>, transform_indices = @transform_11, window_bounds = array<i64: 1, 32>}, {pipeline_mode = #tpu.pipeline_mode<synchronous>, transform_indices = @transform_12, window_bounds = array<i64: 1, 32>}, {transform_indices = @transform_13, window_bounds = array<i64: 1, 8, 32>}]} {
    %c0_i32 = arith.constant 0 : i32
    %0 = arith.cmpi eq, %arg1, %c0_i32 : i32
    %1 = arith.extui %0 : i1 to i32
    %c0_i32_0 = arith.constant 0 : i32
    %2 = arith.cmpi ne, %1, %c0_i32_0 : i32
    scf.if %2 {
      %cst_75 = arith.constant 0.000000e+00 : f32
      %221 = vector.broadcast %cst_75 : f32 to vector<16x32xf32>
      %c0_76 = arith.constant 0 : index
      %c0_77 = arith.constant 0 : index
      %222 = vector.load %arg16[%c0_76, %c0_77] : memref<16x32xf32, #tpu.memory_space<vmem>>, vector<16x32xf32>
      tpu.vector_store %arg16[%c0_76, %c0_77], %221 {strides = array<i32>} : memref<16x32xf32, #tpu.memory_space<vmem>>, vector<16x32xf32>,
      %cst_78 = arith.constant 0.000000e+00 : f32
      %223 = vector.broadcast %cst_78 : f32 to vector<1x32xf32>
      %c0_79 = arith.constant 0 : index
      %c0_80 = arith.constant 0 : index
      %224 = vector.load %arg17[%c0_79, %c0_80] : memref<1x32xf32, #tpu.memory_space<vmem>>, vector<1x32xf32>
      tpu.vector_store %arg17[%c0_79, %c0_80], %223 {strides = array<i32>} : memref<1x32xf32, #tpu.memory_space<vmem>>, vector<1x32xf32>,
    } else {
    }
    %c0 = arith.constant 0 : index
    %c0_1 = arith.constant 0 : index
    %c0_2 = arith.constant 0 : index
    %3 = vector.load %arg2[%c0, %c0_1, %c0_2] : memref<1x8x32xf32, #tpu.memory_space<vmem>>, vector<1x8x32xf32>
    %4 = vector.shape_cast %3 : vector<1x8x32xf32> to vector<8x32xf32>
    %c0_3 = arith.constant 0 : index
    %c0_4 = arith.constant 0 : index
    %5 = vector.load %arg3[%c0_3, %c0_4] : memref<32x32xf32, #tpu.memory_space<vmem>>, vector<32x32xf32>
    %cst = arith.constant dense<0.000000e+00> : vector<8x32xf32>
    %6 = tpu.matmul %4, %5, %cst {dimension_numbers = #tpu.dot_dimension_numbers<[1], [0], [0], [1], [0, 0, 1, 1], [], []>} : vector<8x32xf32>, vector<32x32xf32>, vector<8x32xf32> -> vector<8x32xf32>
    %c0_5 = arith.constant 0 : index
    %c0_6 = arith.constant 0 : index
    %7 = vector.load %arg4[%c0_5, %c0_6] : memref<32x32xf32, #tpu.memory_space<vmem>>, vector<32x32xf32>
    %cst_7 = arith.constant dense<0.000000e+00> : vector<8x32xf32>
    %8 = tpu.matmul %4, %7, %cst_7 {dimension_numbers = #tpu.dot_dimension_numbers<[1], [0], [0], [1], [0, 0, 1, 1], [], []>} : vector<8x32xf32>, vector<32x32xf32>, vector<8x32xf32> -> vector<8x32xf32>
    %c1_i32 = arith.constant 1 : i32
    %9 = tpu.dynamic_rotate %6 by %c1_i32 dim 0 : vector<8x32xf32>, i32 -> vector<8x32xf32>
    %10 = tpu.iota {dimensions = array<i32: 0>} : vector<8x32xi32>
    %c0_i32_8 = arith.constant 0 : i32
    %11 = vector.broadcast %c0_i32_8 : i32 to vector<8x32xi32>
    %12 = arith.cmpi eq, %10, %11 : vector<8x32xi32>
    %c0_9 = arith.constant 0 : index
    %c0_10 = arith.constant 0 : index
    %13 = vector.load %arg17[%c0_9, %c0_10] : memref<1x32xf32, #tpu.memory_space<vmem>>, vector<1x32xf32>
    %14 = vector.shape_cast %13 : vector<1x32xf32> to vector<1x32xf32>
    %15 = vector.broadcast %14 : vector<1x32xf32> to vector<8x32xf32>
    %16 = arith.select %12, %15, %9 : vector<8x32xi1>, vector<8x32xf32>
    %c0_11 = arith.constant 0 : index
    %c0_12 = arith.constant 0 : index
    %17 = vector.load %arg5[%c0_11, %c0_12] : memref<2x32xf32, #tpu.memory_space<vmem>>, vector<1x32xf32>
    %18 = vector.broadcast %17 : vector<1x32xf32> to vector<8x32xf32>
    %19 = arith.mulf %16, %18 : vector<8x32xf32>
    %c1 = arith.constant 1 : index
    %c0_13 = arith.constant 0 : index
    %20 = vector.load %arg5[%c1, %c0_13] : memref<2x32xf32, #tpu.memory_space<vmem>>, vector<1x32xf32>
    %21 = vector.broadcast %20 : vector<1x32xf32> to vector<8x32xf32>
    %22 = arith.mulf %6, %21 : vector<8x32xf32>
    %23 = arith.addf %19, %22 : vector<8x32xf32>
    %c0_14 = arith.constant 0 : index
    %c0_15 = arith.constant 0 : index
    %24 = vector.load %arg6[%c0_14, %c0_15] : memref<1x32xf32, #tpu.memory_space<vmem>>, vector<1x32xf32>
    %25 = vector.broadcast %24 : vector<1x32xf32> to vector<8x32xf32>
    %26 = arith.addf %23, %25 : vector<8x32xf32>
    %27 = arith.negf %26 : vector<8x32xf32>
    %28 = math.exp %27 : vector<8x32xf32>
    %cst_16 = arith.constant 1.000000e+00 : f32
    %29 = vector.broadcast %cst_16 : f32 to vector<8x32xf32>
    %30 = arith.addf %29, %28 : vector<8x32xf32>
    %31 = arith.divf %29, %30 : vector<8x32xf32>
    %32 = arith.mulf %26, %31 : vector<8x32xf32>
    %33 = vector.extract_strided_slice %6 {offsets = [7, 0], sizes = [1, 32], strides = [1, 1]} : vector<8x32xf32> to vector<1x32xf32>
    %c0_17 = arith.constant 0 : index
    %c0_18 = arith.constant 0 : index
    %34 = vector.load %arg17[%c0_17, %c0_18] : memref<1x32xf32, #tpu.memory_space<vmem>>, vector<1x32xf32>
    tpu.vector_store %arg17[%c0_17, %c0_18], %33 {strides = array<i32>} : memref<1x32xf32, #tpu.memory_space<vmem>>, vector<1x32xf32>,
    %c0_19 = arith.constant 0 : index
    %c0_20 = arith.constant 0 : index
    %35 = vector.load %arg7[%c0_19, %c0_20] : memref<32x128xf32, #tpu.memory_space<vmem>>, vector<32x128xf32>
    %cst_21 = arith.constant dense<0.000000e+00> : vector<8x128xf32>
    %36 = tpu.matmul %32, %35, %cst_21 {dimension_numbers = #tpu.dot_dimension_numbers<[1], [0], [0], [1], [0, 0, 1, 1], [], []>} : vector<8x32xf32>, vector<32x128xf32>, vector<8x128xf32> -> vector<8x128xf32>
    %c0_22 = arith.constant 0 : index
    %c0_23 = arith.constant 0 : index
    %37 = vector.load %arg20[%c0_22, %c0_23] : memref<8x128xf32, #tpu.memory_space<vmem>>, vector<8x128xf32>
    tpu.vector_store %arg20[%c0_22, %c0_23], %36 {strides = array<i32>} : memref<8x128xf32, #tpu.memory_space<vmem>>, vector<8x128xf32>,
    %38 = vector.extract_strided_slice %36 {offsets = [0, 0], sizes = [8, 2], strides = [1, 1]} : vector<8x128xf32> to vector<8x2xf32>
    %c0_24 = arith.constant 0 : index
    %c0_25 = arith.constant 0 : index
    %39 = vector.load %arg8[%c0_24, %c0_25] : memref<2x32xf32, #tpu.memory_space<vmem>>, vector<2x32xf32>
    %cst_26 = arith.constant dense<0.000000e+00> : vector<8x32xf32>
    %40 = tpu.matmul %38, %39, %cst_26 {dimension_numbers = #tpu.dot_dimension_numbers<[1], [0], [0], [1], [0, 0, 1, 1], [], []>} : vector<8x2xf32>, vector<2x32xf32>, vector<8x32xf32> -> vector<8x32xf32>
    %c0_27 = arith.constant 0 : index
    %c0_28 = arith.constant 0 : index
    %41 = vector.load %arg9[%c0_27, %c0_28] : memref<1x32xf32, #tpu.memory_space<vmem>>, vector<1x32xf32>
    %42 = vector.broadcast %41 : vector<1x32xf32> to vector<8x32xf32>
    %43 = arith.addf %40, %42 : vector<8x32xf32>
    %cst_29 = arith.constant 0.000000e+00 : f32
    %44 = vector.broadcast %cst_29 : f32 to vector<8x32xf32>
    %45 = arith.maximumf %43, %44 : vector<8x32xf32>
    %46 = vector.broadcast %cst_29 : f32 to vector<8x32xf32>
    %47 = arith.subf %43, %46 : vector<8x32xf32>
    %48 = arith.cmpf one, %47, %47 : vector<8x32xf32>
    %49 = vector.broadcast %cst_29 : f32 to vector<8x32xf32>
    %50 = arith.addf %43, %49 : vector<8x32xf32>
    %51 = math.absf %47 : vector<8x32xf32>
    %cst_30 = arith.constant 0.000000e+00 : f32
    %52 = vector.broadcast %cst_30 : f32 to vector<8x32xf32>
    %53 = arith.subf %52, %51 : vector<8x32xf32>
    %54 = math.exp %53 : vector<8x32xf32>
    %55 = math.log1p %54 : vector<8x32xf32>
    %56 = arith.addf %45, %55 : vector<8x32xf32>
    %57 = arith.select %48, %50, %56 : vector<8x32xi1>, vector<8x32xf32>
    %c0_31 = arith.constant 0 : index
    %c0_32 = arith.constant 0 : index
    %58 = vector.load %arg18[%c0_31, %c0_32] : memref<8x32xf32, #tpu.memory_space<vmem>>, vector<8x32xf32>
    tpu.vector_store %arg18[%c0_31, %c0_32], %57 {strides = array<i32>} : memref<8x32xf32, #tpu.memory_space<vmem>>, vector<8x32xf32>,
    %59 = arith.mulf %57, %32 : vector<8x32xf32>
    %c0_33 = arith.constant 0 : index
    %c0_34 = arith.constant 0 : index
    %60 = vector.load %arg19[%c0_33, %c0_34] : memref<8x32xf32, #tpu.memory_space<vmem>>, vector<8x32xf32>
    tpu.vector_store %arg19[%c0_33, %c0_34], %59 {strides = array<i32>} : memref<8x32xf32, #tpu.memory_space<vmem>>, vector<8x32xf32>,
    %c0_35 = arith.constant 0 : index
    %c0_36 = arith.constant 0 : index
    %61 = vector.load %arg10[%c0_35, %c0_36] : memref<16x32xf32, #tpu.memory_space<vmem>>, vector<16x32xf32>
    %c0_37 = arith.constant 0 : index
    %c0_38 = arith.constant 0 : index
    %62 = vector.load %arg16[%c0_37, %c0_38] : memref<16x32xf32, #tpu.memory_space<vmem>>, vector<16x32xf32>
    %c0_i32_39 = arith.constant 0 : i32
    %c8_i32 = arith.constant 8 : i32
    %63 = arith.muli %c0_i32_39, %c8_i32 : i32
    %64 = tpu.assume_multiple %63, 8 : i32
    %65 = arith.index_cast %64 : i32 to index
    %c0_40 = arith.constant 0 : index
    %66 = vector.load %arg18[%65, %c0_40] : memref<8x32xf32, #tpu.memory_space<vmem>>, vector<8x32xf32>
    %67 = arith.index_cast %64 : i32 to index
    %c0_41 = arith.constant 0 : index
    %68 = vector.load %arg19[%67, %c0_41] : memref<8x32xf32, #tpu.memory_space<vmem>>, vector<8x32xf32>
    %69 = arith.index_cast %64 : i32 to index
    %c0_42 = arith.constant 0 : index
    %70 = vector.load %arg20[%69, %c0_42] : memref<8x128xf32, #tpu.memory_space<vmem>>, vector<8x128xf32>
    %71 = tpu.transpose %70, [1, 0] : vector<8x128xf32> -> vector<128x8xf32>
    %72 = vector.extract_strided_slice %66 {offsets = [0, 0], sizes = [1, 32], strides = [1, 1]} : vector<8x32xf32> to vector<1x32xf32>
    %73 = vector.broadcast %72 : vector<1x32xf32> to vector<16x32xf32>
    %74 = arith.mulf %73, %61 : vector<16x32xf32>
    %75 = math.exp %74 : vector<16x32xf32>
    %76 = vector.extract_strided_slice %71 {offsets = [2, 0], sizes = [16, 1], strides = [1, 1]} : vector<128x8xf32> to vector<16x1xf32>
    %77 = arith.mulf %75, %62 : vector<16x32xf32>
    %78 = vector.extract_strided_slice %68 {offsets = [0, 0], sizes = [1, 32], strides = [1, 1]} : vector<8x32xf32> to vector<1x32xf32>
    %79 = vector.broadcast %78 : vector<1x32xf32> to vector<16x32xf32>
    %80 = vector.broadcast %76 : vector<16x1xf32> to vector<16x32xf32>
    %81 = arith.mulf %79, %80 : vector<16x32xf32>
    %82 = arith.addf %77, %81 : vector<16x32xf32>
    %83 = vector.extract_strided_slice %70 {offsets = [0, 18], sizes = [1, 16], strides = [1, 1]} : vector<8x128xf32> to vector<1x16xf32>
    %cst_43 = arith.constant dense<0.000000e+00> : vector<1x32xf32>
    %84 = tpu.matmul %83, %82, %cst_43 {dimension_numbers = #tpu.dot_dimension_numbers<[1], [0], [0], [1], [0, 0, 1, 1], [], []>} : vector<1x16xf32>, vector<16x32xf32>, vector<1x32xf32> -> vector<1x32xf32>
    %85 = vector.extract_strided_slice %66 {offsets = [1, 0], sizes = [1, 32], strides = [1, 1]} : vector<8x32xf32> to vector<1x32xf32>
    %86 = vector.broadcast %85 : vector<1x32xf32> to vector<16x32xf32>
    %87 = arith.mulf %86, %61 : vector<16x32xf32>
    %88 = math.exp %87 : vector<16x32xf32>
    %89 = vector.extract_strided_slice %71 {offsets = [2, 1], sizes = [16, 1], strides = [1, 1]} : vector<128x8xf32> to vector<16x1xf32>
    %90 = arith.mulf %88, %82 : vector<16x32xf32>
    %91 = vector.extract_strided_slice %68 {offsets = [1, 0], sizes = [1, 32], strides = [1, 1]} : vector<8x32xf32> to vector<1x32xf32>
    %92 = vector.broadcast %91 : vector<1x32xf32> to vector<16x32xf32>
    %93 = vector.broadcast %89 : vector<16x1xf32> to vector<16x32xf32>
    %94 = arith.mulf %92, %93 : vector<16x32xf32>
    %95 = arith.addf %90, %94 : vector<16x32xf32>
    %96 = vector.extract_strided_slice %70 {offsets = [1, 18], sizes = [1, 16], strides = [1, 1]} : vector<8x128xf32> to vector<1x16xf32>
    %cst_44 = arith.constant dense<0.000000e+00> : vector<1x32xf32>
    %97 = tpu.matmul %96, %95, %cst_44 {dimension_numbers = #tpu.dot_dimension_numbers<[1], [0], [0], [1], [0, 0, 1, 1], [], []>} : vector<1x16xf32>, vector<16x32xf32>, vector<1x32xf32> -> vector<1x32xf32>
    %98 = vector.extract_strided_slice %66 {offsets = [2, 0], sizes = [1, 32], strides = [1, 1]} : vector<8x32xf32> to vector<1x32xf32>
    %99 = vector.broadcast %98 : vector<1x32xf32> to vector<16x32xf32>
    %100 = arith.mulf %99, %61 : vector<16x32xf32>
    %101 = math.exp %100 : vector<16x32xf32>
    %102 = vector.extract_strided_slice %71 {offsets = [2, 2], sizes = [16, 1], strides = [1, 1]} : vector<128x8xf32> to vector<16x1xf32>
    %103 = arith.mulf %101, %95 : vector<16x32xf32>
    %104 = vector.extract_strided_slice %68 {offsets = [2, 0], sizes = [1, 32], strides = [1, 1]} : vector<8x32xf32> to vector<1x32xf32>
    %105 = vector.broadcast %104 : vector<1x32xf32> to vector<16x32xf32>
    %106 = vector.broadcast %102 : vector<16x1xf32> to vector<16x32xf32>
    %107 = arith.mulf %105, %106 : vector<16x32xf32>
    %108 = arith.addf %103, %107 : vector<16x32xf32>
    %109 = vector.extract_strided_slice %70 {offsets = [2, 18], sizes = [1, 16], strides = [1, 1]} : vector<8x128xf32> to vector<1x16xf32>
    %cst_45 = arith.constant dense<0.000000e+00> : vector<1x32xf32>
    %110 = tpu.matmul %109, %108, %cst_45 {dimension_numbers = #tpu.dot_dimension_numbers<[1], [0], [0], [1], [0, 0, 1, 1], [], []>} : vector<1x16xf32>, vector<16x32xf32>, vector<1x32xf32> -> vector<1x32xf32>
    %111 = vector.extract_strided_slice %66 {offsets = [3, 0], sizes = [1, 32], strides = [1, 1]} : vector<8x32xf32> to vector<1x32xf32>
    %112 = vector.broadcast %111 : vector<1x32xf32> to vector<16x32xf32>
    %113 = arith.mulf %112, %61 : vector<16x32xf32>
    %114 = math.exp %113 : vector<16x32xf32>
    %115 = vector.extract_strided_slice %71 {offsets = [2, 3], sizes = [16, 1], strides = [1, 1]} : vector<128x8xf32> to vector<16x1xf32>
    %116 = arith.mulf %114, %108 : vector<16x32xf32>
    %117 = vector.extract_strided_slice %68 {offsets = [3, 0], sizes = [1, 32], strides = [1, 1]} : vector<8x32xf32> to vector<1x32xf32>
    %118 = vector.broadcast %117 : vector<1x32xf32> to vector<16x32xf32>
    %119 = vector.broadcast %115 : vector<16x1xf32> to vector<16x32xf32>
    %120 = arith.mulf %118, %119 : vector<16x32xf32>
    %121 = arith.addf %116, %120 : vector<16x32xf32>
    %122 = vector.extract_strided_slice %70 {offsets = [3, 18], sizes = [1, 16], strides = [1, 1]} : vector<8x128xf32> to vector<1x16xf32>
    %cst_46 = arith.constant dense<0.000000e+00> : vector<1x32xf32>
    %123 = tpu.matmul %122, %121, %cst_46 {dimension_numbers = #tpu.dot_dimension_numbers<[1], [0], [0], [1], [0, 0, 1, 1], [], []>} : vector<1x16xf32>, vector<16x32xf32>, vector<1x32xf32> -> vector<1x32xf32>
    %124 = vector.extract_strided_slice %66 {offsets = [4, 0], sizes = [1, 32], strides = [1, 1]} : vector<8x32xf32> to vector<1x32xf32>
    %125 = vector.broadcast %124 : vector<1x32xf32> to vector<16x32xf32>
    %126 = arith.mulf %125, %61 : vector<16x32xf32>
    %127 = math.exp %126 : vector<16x32xf32>
    %128 = vector.extract_strided_slice %71 {offsets = [2, 4], sizes = [16, 1], strides = [1, 1]} : vector<128x8xf32> to vector<16x1xf32>
    %129 = arith.mulf %127, %121 : vector<16x32xf32>
    %130 = vector.extract_strided_slice %68 {offsets = [4, 0], sizes = [1, 32], strides = [1, 1]} : vector<8x32xf32> to vector<1x32xf32>
    %131 = vector.broadcast %130 : vector<1x32xf32> to vector<16x32xf32>
    %132 = vector.broadcast %128 : vector<16x1xf32> to vector<16x32xf32>
    %133 = arith.mulf %131, %132 : vector<16x32xf32>
    %134 = arith.addf %129, %133 : vector<16x32xf32>
    %135 = vector.extract_strided_slice %70 {offsets = [4, 18], sizes = [1, 16], strides = [1, 1]} : vector<8x128xf32> to vector<1x16xf32>
    %cst_47 = arith.constant dense<0.000000e+00> : vector<1x32xf32>
    %136 = tpu.matmul %135, %134, %cst_47 {dimension_numbers = #tpu.dot_dimension_numbers<[1], [0], [0], [1], [0, 0, 1, 1], [], []>} : vector<1x16xf32>, vector<16x32xf32>, vector<1x32xf32> -> vector<1x32xf32>
    %137 = vector.extract_strided_slice %66 {offsets = [5, 0], sizes = [1, 32], strides = [1, 1]} : vector<8x32xf32> to vector<1x32xf32>
    %138 = vector.broadcast %137 : vector<1x32xf32> to vector<16x32xf32>
    %139 = arith.mulf %138, %61 : vector<16x32xf32>
    %140 = math.exp %139 : vector<16x32xf32>
    %141 = vector.extract_strided_slice %71 {offsets = [2, 5], sizes = [16, 1], strides = [1, 1]} : vector<128x8xf32> to vector<16x1xf32>
    %142 = arith.mulf %140, %134 : vector<16x32xf32>
    %143 = vector.extract_strided_slice %68 {offsets = [5, 0], sizes = [1, 32], strides = [1, 1]} : vector<8x32xf32> to vector<1x32xf32>
    %144 = vector.broadcast %143 : vector<1x32xf32> to vector<16x32xf32>
    %145 = vector.broadcast %141 : vector<16x1xf32> to vector<16x32xf32>
    %146 = arith.mulf %144, %145 : vector<16x32xf32>
    %147 = arith.addf %142, %146 : vector<16x32xf32>
    %148 = vector.extract_strided_slice %70 {offsets = [5, 18], sizes = [1, 16], strides = [1, 1]} : vector<8x128xf32> to vector<1x16xf32>
    %cst_48 = arith.constant dense<0.000000e+00> : vector<1x32xf32>
    %149 = tpu.matmul %148, %147, %cst_48 {dimension_numbers = #tpu.dot_dimension_numbers<[1], [0], [0], [1], [0, 0, 1, 1], [], []>} : vector<1x16xf32>, vector<16x32xf32>, vector<1x32xf32> -> vector<1x32xf32>
    %150 = vector.extract_strided_slice %66 {offsets = [6, 0], sizes = [1, 32], strides = [1, 1]} : vector<8x32xf32> to vector<1x32xf32>
    %151 = vector.broadcast %150 : vector<1x32xf32> to vector<16x32xf32>
    %152 = arith.mulf %151, %61 : vector<16x32xf32>
    %153 = math.exp %152 : vector<16x32xf32>
    %154 = vector.extract_strided_slice %71 {offsets = [2, 6], sizes = [16, 1], strides = [1, 1]} : vector<128x8xf32> to vector<16x1xf32>
    %155 = arith.mulf %153, %147 : vector<16x32xf32>
    %156 = vector.extract_strided_slice %68 {offsets = [6, 0], sizes = [1, 32], strides = [1, 1]} : vector<8x32xf32> to vector<1x32xf32>
    %157 = vector.broadcast %156 : vector<1x32xf32> to vector<16x32xf32>
    %158 = vector.broadcast %154 : vector<16x1xf32> to vector<16x32xf32>
    %159 = arith.mulf %157, %158 : vector<16x32xf32>
    %160 = arith.addf %155, %159 : vector<16x32xf32>
    %161 = vector.extract_strided_slice %70 {offsets = [6, 18], sizes = [1, 16], strides = [1, 1]} : vector<8x128xf32> to vector<1x16xf32>
    %cst_49 = arith.constant dense<0.000000e+00> : vector<1x32xf32>
    %162 = tpu.matmul %161, %160, %cst_49 {dimension_numbers = #tpu.dot_dimension_numbers<[1], [0], [0], [1], [0, 0, 1, 1], [], []>} : vector<1x16xf32>, vector<16x32xf32>, vector<1x32xf32> -> vector<1x32xf32>
    %163 = vector.extract_strided_slice %66 {offsets = [7, 0], sizes = [1, 32], strides = [1, 1]} : vector<8x32xf32> to vector<1x32xf32>
    %164 = vector.broadcast %163 : vector<1x32xf32> to vector<16x32xf32>
    %165 = arith.mulf %164, %61 : vector<16x32xf32>
    %166 = math.exp %165 : vector<16x32xf32>
    %167 = vector.extract_strided_slice %71 {offsets = [2, 7], sizes = [16, 1], strides = [1, 1]} : vector<128x8xf32> to vector<16x1xf32>
    %168 = arith.mulf %166, %160 : vector<16x32xf32>
    %169 = vector.extract_strided_slice %68 {offsets = [7, 0], sizes = [1, 32], strides = [1, 1]} : vector<8x32xf32> to vector<1x32xf32>
    %170 = vector.broadcast %169 : vector<1x32xf32> to vector<16x32xf32>
    %171 = vector.broadcast %167 : vector<16x1xf32> to vector<16x32xf32>
    %172 = arith.mulf %170, %171 : vector<16x32xf32>
    %173 = arith.addf %168, %172 : vector<16x32xf32>
    %174 = vector.extract_strided_slice %70 {offsets = [7, 18], sizes = [1, 16], strides = [1, 1]} : vector<8x128xf32> to vector<1x16xf32>
    %cst_50 = arith.constant dense<0.000000e+00> : vector<1x32xf32>
    %175 = tpu.matmul %174, %173, %cst_50 {dimension_numbers = #tpu.dot_dimension_numbers<[1], [0], [0], [1], [0, 0, 1, 1], [], []>} : vector<1x16xf32>, vector<16x32xf32>, vector<1x32xf32> -> vector<1x32xf32>
    %176 = tpu.concatenate %84, %97, %110, %123, %136, %149, %162, %175 in 0 : vector<1x32xf32>, vector<1x32xf32>, vector<1x32xf32>, vector<1x32xf32>, vector<1x32xf32>, vector<1x32xf32>, vector<1x32xf32>, vector<1x32xf32> -> vector<8x32xf32>
    %177 = arith.index_cast %64 : i32 to index
    %c0_51 = arith.constant 0 : index
    %178 = vector.load %arg21[%177, %c0_51] : memref<8x32xf32, #tpu.memory_space<vmem>>, vector<8x32xf32>
    tpu.vector_store %arg21[%177, %c0_51], %176 {strides = array<i32>} : memref<8x32xf32, #tpu.memory_space<vmem>>, vector<8x32xf32>,
    %c1_i32_52 = arith.constant 1 : i32
    %c0_53 = arith.constant 0 : index
    %c0_54 = arith.constant 0 : index
    %179 = vector.load %arg16[%c0_53, %c0_54] : memref<16x32xf32, #tpu.memory_space<vmem>>, vector<16x32xf32>
    tpu.vector_store %arg16[%c0_53, %c0_54], %173 {strides = array<i32>} : memref<16x32xf32, #tpu.memory_space<vmem>>, vector<16x32xf32>,
    %c0_55 = arith.constant 0 : index
    %c0_56 = arith.constant 0 : index
    %180 = vector.load %arg21[%c0_55, %c0_56] : memref<8x32xf32, #tpu.memory_space<vmem>>, vector<8x32xf32>
    %c0_57 = arith.constant 0 : index
    %c0_58 = arith.constant 0 : index
    %181 = vector.load %arg11[%c0_57, %c0_58] : memref<1x32xf32, #tpu.memory_space<vmem>>, vector<1x32xf32>
    %182 = vector.broadcast %181 : vector<1x32xf32> to vector<8x32xf32>
    %183 = arith.mulf %182, %32 : vector<8x32xf32>
    %184 = arith.addf %180, %183 : vector<8x32xf32>
    %185 = arith.negf %8 : vector<8x32xf32>
    %186 = math.exp %185 : vector<8x32xf32>
    %cst_59 = arith.constant 1.000000e+00 : f32
    %187 = vector.broadcast %cst_59 : f32 to vector<8x32xf32>
    %188 = arith.addf %187, %186 : vector<8x32xf32>
    %189 = arith.divf %187, %188 : vector<8x32xf32>
    %190 = arith.mulf %8, %189 : vector<8x32xf32>
    %191 = arith.mulf %184, %190 : vector<8x32xf32>
    %c0_60 = arith.constant 0 : index
    %c0_61 = arith.constant 0 : index
    %192 = vector.load %arg12[%c0_60, %c0_61] : memref<32x32xf32, #tpu.memory_space<vmem>>, vector<32x32xf32>
    %cst_62 = arith.constant dense<0.000000e+00> : vector<8x32xf32>
    %193 = tpu.matmul %191, %192, %cst_62 {dimension_numbers = #tpu.dot_dimension_numbers<[1], [0], [0], [1], [0, 0, 1, 1], [], []>} : vector<8x32xf32>, vector<32x32xf32>, vector<8x32xf32> -> vector<8x32xf32>
    %cst_63 = arith.constant dense<0.000000e+00> : vector<8xf32>
    %194 = vector.multi_reduction <add>, %193, %cst_63 [1] : vector<8x32xf32> to vector<8xf32>
    %195 = vector.shape_cast %194 : vector<8xf32> to vector<8x1xf32>
    %cst_64 = arith.constant 3.200000e+01 : f32
    %196 = vector.broadcast %cst_64 : f32 to vector<8x1xf32>
    %197 = arith.divf %195, %196 : vector<8x1xf32>
    %198 = vector.broadcast %197 : vector<8x1xf32> to vector<8x32xf32>
    %199 = arith.subf %193, %198 : vector<8x32xf32>
    %200 = arith.mulf %199, %199 : vector<8x32xf32>
    %cst_65 = arith.constant dense<0.000000e+00> : vector<8xf32>
    %201 = vector.multi_reduction <add>, %200, %cst_65 [1] : vector<8x32xf32> to vector<8xf32>
    %202 = vector.shape_cast %201 : vector<8xf32> to vector<8x1xf32>
    %cst_66 = arith.constant 3.200000e+01 : f32
    %203 = vector.broadcast %cst_66 : f32 to vector<8x1xf32>
    %204 = arith.divf %202, %203 : vector<8x1xf32>
    %205 = vector.broadcast %197 : vector<8x1xf32> to vector<8x32xf32>
    %206 = arith.subf %193, %205 : vector<8x32xf32>
    %cst_67 = arith.constant 9.99999974E-6 : f32
    %207 = vector.broadcast %cst_67 : f32 to vector<8x1xf32>
    %208 = arith.addf %204, %207 : vector<8x1xf32>
    %209 = math.rsqrt %208 : vector<8x1xf32>
    %210 = vector.broadcast %209 : vector<8x1xf32> to vector<8x32xf32>
    %211 = arith.mulf %206, %210 : vector<8x32xf32>
    %c0_68 = arith.constant 0 : index
    %c0_69 = arith.constant 0 : index
    %212 = vector.load %arg13[%c0_68, %c0_69] : memref<1x32xf32, #tpu.memory_space<vmem>>, vector<1x32xf32>
    %213 = vector.broadcast %212 : vector<1x32xf32> to vector<8x32xf32>
    %214 = arith.mulf %211, %213 : vector<8x32xf32>
    %c0_70 = arith.constant 0 : index
    %c0_71 = arith.constant 0 : index
    %215 = vector.load %arg14[%c0_70, %c0_71] : memref<1x32xf32, #tpu.memory_space<vmem>>, vector<1x32xf32>
    %216 = vector.broadcast %215 : vector<1x32xf32> to vector<8x32xf32>
    %217 = arith.addf %214, %216 : vector<8x32xf32>
    %c0_72 = arith.constant 0 : index
    %c0_73 = arith.constant 0 : index
    %c0_74 = arith.constant 0 : index
    %218 = vector.load %arg15[%c0_72, %c0_73, %c0_74] : memref<1x8x32xf32, #tpu.memory_space<vmem>>, vector<1x8x32xf32>
    %219 = vector.shape_cast %218 : vector<1x8x32xf32> to vector<8x32xf32>
    %220 = vector.shape_cast %217 : vector<8x32xf32> to vector<1x8x32xf32>
    tpu.vector_store %arg15[%c0_72, %c0_73, %c0_74], %220 {strides = array<i32>} : memref<1x8x32xf32, #tpu.memory_space<vmem>>, vector<1x8x32xf32>,
    return
  }
  func.func @transform_0(%arg0: i32, %arg1: i32) -> (i32, i32, i32) {
    %c0_i32 = arith.constant 0 : i32
    %c0_i32_0 = arith.constant 0 : i32
    return %arg0, %arg1, %c0_i32 : i32, i32, i32
  }
  func.func @transform_1(%arg0: i32, %arg1: i32) -> (i32, i32) {
    %c0_i32 = arith.constant 0 : i32
    %c0_i32_0 = arith.constant 0 : i32
    %c0_i32_1 = arith.constant 0 : i32
    return %c0_i32, %c0_i32_0 : i32, i32
  }
  func.func @transform_2(%arg0: i32, %arg1: i32) -> (i32, i32) {
    %c0_i32 = arith.constant 0 : i32
    %c0_i32_0 = arith.constant 0 : i32
    %c0_i32_1 = arith.constant 0 : i32
    return %c0_i32, %c0_i32_0 : i32, i32
  }
  func.func @transform_3(%arg0: i32, %arg1: i32) -> (i32, i32) {
    %c0_i32 = arith.constant 0 : i32
    %c0_i32_0 = arith.constant 0 : i32
    %c0_i32_1 = arith.constant 0 : i32
    return %c0_i32, %c0_i32_0 : i32, i32
  }
  func.func @transform_4(%arg0: i32, %arg1: i32) -> (i32, i32) {
    %c0_i32 = arith.constant 0 : i32
    %c0_i32_0 = arith.constant 0 : i32
    %c0_i32_1 = arith.constant 0 : i32
    return %c0_i32, %c0_i32_0 : i32, i32
  }
  func.func @transform_5(%arg0: i32, %arg1: i32) -> (i32, i32) {
    %c0_i32 = arith.constant 0 : i32
    %c0_i32_0 = arith.constant 0 : i32
    %c0_i32_1 = arith.constant 0 : i32
    return %c0_i32, %c0_i32_0 : i32, i32
  }
  func.func @transform_6(%arg0: i32, %arg1: i32) -> (i32, i32) {
    %c0_i32 = arith.constant 0 : i32
    %c0_i32_0 = arith.constant 0 : i32
    %c0_i32_1 = arith.constant 0 : i32
    return %c0_i32, %c0_i32_0 : i32, i32
  }
  func.func @transform_7(%arg0: i32, %arg1: i32) -> (i32, i32) {
    %c0_i32 = arith.constant 0 : i32
    %c0_i32_0 = arith.constant 0 : i32
    %c0_i32_1 = arith.constant 0 : i32
    return %c0_i32, %c0_i32_0 : i32, i32
  }
  func.func @transform_8(%arg0: i32, %arg1: i32) -> (i32, i32) {
    %c0_i32 = arith.constant 0 : i32
    %c0_i32_0 = arith.constant 0 : i32
    %c0_i32_1 = arith.constant 0 : i32
    return %c0_i32, %c0_i32_0 : i32, i32
  }
  func.func @transform_9(%arg0: i32, %arg1: i32) -> (i32, i32) {
    %c0_i32 = arith.constant 0 : i32
    %c0_i32_0 = arith.constant 0 : i32
    %c0_i32_1 = arith.constant 0 : i32
    return %c0_i32, %c0_i32_0 : i32, i32
  }
  func.func @transform_10(%arg0: i32, %arg1: i32) -> (i32, i32) {
    %c0_i32 = arith.constant 0 : i32
    %c0_i32_0 = arith.constant 0 : i32
    %c0_i32_1 = arith.constant 0 : i32
    return %c0_i32, %c0_i32_0 : i32, i32
  }
  func.func @transform_11(%arg0: i32, %arg1: i32) -> (i32, i32) {
    %c0_i32 = arith.constant 0 : i32
    %c0_i32_0 = arith.constant 0 : i32
    %c0_i32_1 = arith.constant 0 : i32
    return %c0_i32, %c0_i32_0 : i32, i32
  }
  func.func @transform_12(%arg0: i32, %arg1: i32) -> (i32, i32) {
    %c0_i32 = arith.constant 0 : i32
    %c0_i32_0 = arith.constant 0 : i32
    %c0_i32_1 = arith.constant 0 : i32
    return %c0_i32, %c0_i32_0 : i32, i32
  }
  func.func @transform_13(%arg0: i32, %arg1: i32) -> (i32, i32, i32) {
    %c0_i32 = arith.constant 0 : i32
    %c0_i32_0 = arith.constant 0 : i32
    return %arg0, %arg1, %c0_i32 : i32, i32, i32
  }
}

</mosaic_0001>

<llo_original>
// kernel: tpu_custom_call.1
$region0: #{tpu_custom_call.1}
  #allocation0 [shape = 'u32[]', space=smem, size = 0x4, offset = 0x4, fixed_abs, tag = 'smem constant byte address 0x4 - core index']
  #allocation1 [shape = 'u32[144,128]{1,0:T(1,128)}', space=vmem, size = 0x12000, scoped, tag = 'internal scratch']
  #allocation2 [shape = 'f32[16,32]{1,0:T(8,128)}', space=vmem, size = 0x2000, scoped, tag = 'scratch operand']
  #allocation3 [shape = 'f32[1,32]{1,0:T(1,128)}', space=vmem, size = 0x200, scoped, tag = 'scratch operand']
  #allocation4 [shape = 'f32[8,32]{1,0:T(8,128)}', space=vmem, size = 0x1000, scoped, tag = 'scratch operand']
  #allocation5 [shape = 'f32[8,32]{1,0:T(8,128)}', space=vmem, size = 0x1000, scoped, tag = 'scratch operand']
  #allocation6 [shape = 'f32[8,128]{1,0:T(8,128)}', space=vmem, size = 0x1000, scoped, tag = 'scratch operand']
  #allocation7 [shape = 'f32[8,32]{1,0:T(8,128)}', space=vmem, size = 0x1000, scoped, tag = 'scratch operand']
  %s0 = inlined_call_operand.hbm [shape: f32[2,16,32], index: 0, kind: input, shape index: {}]
  %s1 = inlined_call_operand.hbm [shape: f32[32,32], index: 1, kind: input, shape index: {}]
  %s2 = inlined_call_operand.hbm [shape: f32[32,32], index: 2, kind: input, shape index: {}]
  %s3 = inlined_call_operand.vmem [shape: f32[2,32], index: 3, kind: input, shape index: {}]
  %s4 = inlined_call_operand.vmem [shape: f32[1,32], index: 4, kind: input, shape index: {}]
  %s5 = inlined_call_operand.hbm [shape: f32[32,128], index: 5, kind: input, shape index: {}]
  %s6 = inlined_call_operand.vmem [shape: f32[2,32], index: 6, kind: input, shape index: {}]
  %s7 = inlined_call_operand.hbm [shape: f32[1,32], index: 7, kind: input, shape index: {}]
  %s8 = inlined_call_operand.hbm [shape: f32[16,32], index: 8, kind: input, shape index: {}]
  %s9 = inlined_call_operand.hbm [shape: f32[1,32], index: 9, kind: input, shape index: {}]
  %s10 = inlined_call_operand.vmem [shape: f32[32,32], index: 10, kind: input, shape index: {}]
  %s11 = inlined_call_operand.vmem [shape: f32[1,32], index: 11, kind: input, shape index: {}]
  %s12 = inlined_call_operand.vmem [shape: f32[1,32], index: 12, kind: input, shape index: {}]
  %s13 = inlined_call_operand.hbm [shape: f32[2,16,32], index: 13, kind: output, shape index: {}]
  %s14 = sld [smem:[#allocation0]]
  $region117: #{tpu_custom_call.1} parent=0
    _
  %s16 = ssub.s32 1, %s14
  %s17 = scalar_select 0, %s16, %s14
  $region1: #{tpu_custom_call.1} parent=0
    #allocation8 [shape = 'u8[8192]{0}', space=vmem, size = 0x2000, scoped, tag = 'input window, operand 0']
    #allocation9 [shape = 's32[2]{0}', space=sflag, size = 0x8, scoped, tag = 'scoped memory for tpu_custom_call.1']
    #allocation10 [shape = 's32[2]{0}', space=sflag, size = 0x8, scoped, tag = 'scoped memory for tpu_custom_call.1']
    #allocation11 [shape = 'u8[16384]{0}', space=vmem, size = 0x4000, scoped, tag = 'input window, operand 1, single buffered']
    #allocation12 [shape = 's32[1]{0}', space=sflag, size = 0x4, scoped, tag = 'scoped memory for tpu_custom_call.1']
    #allocation13 [shape = 'u8[16384]{0}', space=vmem, size = 0x4000, scoped, tag = 'input window, operand 2, single buffered']
    #allocation14 [shape = 'u8[16384]{0}', space=vmem, size = 0x4000, scoped, tag = 'input window, operand 5, single buffered']
    #allocation15 [shape = 's32[1]{0}', space=sflag, size = 0x4, scoped, tag = 'scoped memory for tpu_custom_call.1']
    #allocation16 [shape = 'u8[512]{0}', space=vmem, size = 0x400, scoped, tag = 'input window, operand 7, single buffered']
    #allocation17 [shape = 'u8[8192]{0}', space=vmem, size = 0x2000, scoped, tag = 'input window, operand 8, single buffered']
    #allocation18 [shape = 's32[1]{0}', space=sflag, size = 0x4, scoped, tag = 'scoped memory for tpu_custom_call.1']
    #allocation19 [shape = 'u8[512]{0}', space=vmem, size = 0x400, scoped, tag = 'input window, operand 9, single buffered']
    #allocation20 [shape = 'u8[8192]{0}', space=vmem, size = 0x2000, scoped, tag = 'output window, operand 0']
    %18 = vsyncpa [#allocation9], 0
    %s19 = scalar_lea.sflag [#allocation9], 1
    %20 = vsyncpa %s19, 0
    %21 = vsyncpa [#allocation12], 0
    %22 = vsyncpa [#allocation15], 0
    %23 = vsyncpa [#allocation18], 0
    %24 = vsyncpa [#allocation10], 0
    %s25 = scalar_lea.sflag [#allocation10], 1
    %26 = vsyncpa %s25, 0
    loop: start=0, step=1, limit=6
    $region2: #{tpu_custom_call.1} parent=1 // loop_pre_header
      _
    $region3: #{tpu_custom_call.1} parent=1 // loop_header
      %s28 = sphi 0, %s32
      %p29 = scmp.ge.s32.totalorder %s28, 6
      %s35 = sphi 0, %s47
      %s36 = sphi 0, %s43
      %s37 = sphi 0, %s35
      %s38 = sphi 0, %s36
      %s39 = sphi 0, %s37
      %s40 = sphi 0, %s38
      %s52 = sphi 0, %s54
      %s55 = sphi 0, %s52
      %s56 = sphi 0, %s55
      %s72 = sphi 0, %s56
      %s76 = sphi 0, %s76
      %s78 = sphi 0, %s76
      %s79 = sphi 0, %s78
      %s93 = sphi 0, %s79
      %s97 = sphi 0, %s97
      %s99 = sphi 0, %s97
      %s100 = sphi 0, %s99
      %s114 = sphi 0, %s100
      %s118 = sphi 0, %s118
      %s120 = sphi 0, %s118
      %s121 = sphi 0, %s120
      %s135 = sphi 0, %s121
      %s139 = sphi 0, %s139
      %s141 = sphi 0, %s139
      %s142 = sphi 0, %s141
      %s156 = sphi 0, %s142
      %s160 = sphi 0, %s160
      %s162 = sphi 0, %s160
      %s163 = sphi 0, %s162
      %s177 = sphi 0, %s163
      %s181 = sphi 0, %s181
      %s183 = sphi 0, %s181
      %s184 = sphi 0, %s183
      %s198 = sphi 0, %s184
      %s202 = sphi 0, %s202
      %s204 = sphi 0, %s202
      %s205 = sphi 0, %s204
      %s219 = sphi 0, %s205
      %s223 = sphi 0, %s223
      %s225 = sphi 0, %s223
      %s226 = sphi 0, %s225
      %s240 = sphi 0, %s226
      %s244 = sphi 0, %s244
      %s246 = sphi 0, %s244
      %s247 = sphi 0, %s246
      %s261 = sphi 0, %s247
      %s265 = sphi 0, %s265
      %s267 = sphi 0, %s265
      %s268 = sphi 0, %s267
      %s282 = sphi 0, %s268
      %s286 = sphi 0, %s286
      %s288 = sphi 0, %s286
      %s289 = sphi 0, %s288
      %s303 = sphi 0, %s289
      %s307 = sphi 0, %s307
      %s309 = sphi 0, %s307
      %s310 = sphi 0, %s309
      %s324 = sphi 0, %s310
      %s332 = sphi 0, %s334
      %s335 = sphi 0, %s332
      %s336 = sphi 0, %s335
      %s352 = sphi 0, %s336
    $region4: #{tpu_custom_call.1} parent=1 // loop_header_branch
      %31 = sbr.rel (%p29) target = $region8
    $region5: #{tpu_custom_call.1} parent=1 // loop_body
      %s33 = ssub.s32 %s28, 1
      %s34 = ssub.s32 %s28, 2
      %s41 = sadd.s32 1, %s36
      %p42 = scmp.ge.s32.totalorder %s41, 2
      %s43 = scalar_select %p42, 0, %s41
      %s44 = sadd.s32 1, %s35
      %s45 = scalar_select %p42, %s44, %s35
      %p46 = scmp.ge.s32.totalorder %s45, 2
      %s47 = scalar_select %p46, 0, %s45
      %s48 = ssub.s32 %s35, %s47
      %s49 = ssub.s32 %s36, %s43
      %s50 = sor.u32 %s48, %s49
      %p51 = scmp.eq.s32.totalorder %s50, 0
      %s53 = sadd.s32 %s52, 1
      %s54 = scalar_select %p51, %s52, %s53
      %p57 = pneg %p51
      %p58 = scmp.eq.s32.totalorder %s28, 3
      %p59 = por %p57, %p58
      %p60 = scmp.ne.s32.totalorder %s52, %s55
      %p61 = scmp.eq.s32.totalorder %s28, 0
      %p62 = por %p60, %p61
      %p63 = scmp.ne.s32.totalorder %s52, %s55
      %p64 = scmp.eq.s32.totalorder %s33, 3
      %p65 = por %p63, %p64
      %p66 = scmp.ne.s32.totalorder %s55, %s56
      %p67 = scmp.eq.s32.totalorder %s33, 0
      %p68 = por %p66, %p67
      %p69 = scmp.ne.s32.totalorder %s55, %s56
      %p70 = scmp.eq.s32.totalorder %s34, 3
      %p71 = por %p69, %p70
      %p73 = scmp.ne.s32.totalorder %s56, %s72
      %p74 = scmp.eq.s32.totalorder %s34, 0
      %p75 = por %p73, %p74
      %s77 = sadd.s32 %s76, 1
      %p80 = scmp.eq.s32.totalorder %s28, 3
      %p81 = scmp.ne.s32.totalorder %s76, %s78
      %p82 = scmp.eq.s32.totalorder %s28, 0
      %p83 = por %p81, %p82
      %p84 = scmp.ne.s32.totalorder %s76, %s78
      %p85 = scmp.eq.s32.totalorder %s33, 3
      %p86 = por %p84, %p85
      %p87 = scmp.ne.s32.totalorder %s78, %s79
      %p88 = scmp.eq.s32.totalorder %s33, 0
      %p89 = por %p87, %p88
      %p90 = scmp.ne.s32.totalorder %s78, %s79
      %p91 = scmp.eq.s32.totalorder %s34, 3
      %p92 = por %p90, %p91
      %p94 = scmp.ne.s32.totalorder %s79, %s93
      %p95 = scmp.eq.s32.totalorder %s34, 0
      %p96 = por %p94, %p95
      %s98 = sadd.s32 %s97, 1
      %p101 = scmp.eq.s32.totalorder %s28, 3
      %p102 = scmp.ne.s32.totalorder %s97, %s99
      %p103 = scmp.eq.s32.totalorder %s28, 0
      %p104 = por %p102, %p103
      %p105 = scmp.ne.s32.totalorder %s97, %s99
      %p106 = scmp.eq.s32.totalorder %s33, 3
      %p107 = por %p105, %p106
      %p108 = scmp.ne.s32.totalorder %s99, %s100
      %p109 = scmp.eq.s32.totalorder %s33, 0
      %p110 = por %p108, %p109
      %p111 = scmp.ne.s32.totalorder %s99, %s100
      %p112 = scmp.eq.s32.totalorder %s34, 3
      %p113 = por %p111, %p112
      %p115 = scmp.ne.s32.totalorder %s100, %s114
      %p116 = scmp.eq.s32.totalorder %s34, 0
      %p117 = por %p115, %p116
      %s119 = sadd.s32 %s118, 1
      %p122 = scmp.eq.s32.totalorder %s28, 3
      %p123 = scmp.ne.s32.totalorder %s118, %s120
      %p124 = scmp.eq.s32.totalorder %s28, 0
      %p125 = por %p123, %p124
      %p126 = scmp.ne.s32.totalorder %s118, %s120
      %p127 = scmp.eq.s32.totalorder %s33, 3
      %p128 = por %p126, %p127
      %p129 = scmp.ne.s32.totalorder %s120, %s121
      %p130 = scmp.eq.s32.totalorder %s33, 0
      %p131 = por %p129, %p130
      %p132 = scmp.ne.s32.totalorder %s120, %s121
      %p133 = scmp.eq.s32.totalorder %s34, 3
      %p134 = por %p132, %p133
      %p136 = scmp.ne.s32.totalorder %s121, %s135
      %p137 = scmp.eq.s32.totalorder %s34, 0
      %p138 = por %p136, %p137
      %s140 = sadd.s32 %s139, 1
      %p143 = scmp.eq.s32.totalorder %s28, 3
      %p144 = scmp.ne.s32.totalorder %s139, %s141
      %p145 = scmp.eq.s32.totalorder %s28, 0
      %p146 = por %p144, %p145
      %p147 = scmp.ne.s32.totalorder %s139, %s141
      %p148 = scmp.eq.s32.totalorder %s33, 3
      %p149 = por %p147, %p148
      %p150 = scmp.ne.s32.totalorder %s141, %s142
      %p151 = scmp.eq.s32.totalorder %s33, 0
      %p152 = por %p150, %p151
      %p153 = scmp.ne.s32.totalorder %s141, %s142
      %p154 = scmp.eq.s32.totalorder %s34, 3
      %p155 = por %p153, %p154
      %p157 = scmp.ne.s32.totalorder %s142, %s156
      %p158 = scmp.eq.s32.totalorder %s34, 0
      %p159 = por %p157, %p158
      %s161 = sadd.s32 %s160, 1
      %p164 = scmp.eq.s32.totalorder %s28, 3
      %p165 = scmp.ne.s32.totalorder %s160, %s162
      %p166 = scmp.eq.s32.totalorder %s28, 0
      %p167 = por %p165, %p166
      %p168 = scmp.ne.s32.totalorder %s160, %s162
      %p169 = scmp.eq.s32.totalorder %s33, 3
      %p170 = por %p168, %p169
      %p171 = scmp.ne.s32.totalorder %s162, %s163
      %p172 = scmp.eq.s32.totalorder %s33, 0
      %p173 = por %p171, %p172
      %p174 = scmp.ne.s32.totalorder %s162, %s163
      %p175 = scmp.eq.s32.totalorder %s34, 3
      %p176 = por %p174, %p175
      %p178 = scmp.ne.s32.totalorder %s163, %s177
      %p179 = scmp.eq.s32.totalorder %s34, 0
      %p180 = por %p178, %p179
      %s182 = sadd.s32 %s181, 1
      %p185 = scmp.eq.s32.totalorder %s28, 3
      %p186 = scmp.ne.s32.totalorder %s181, %s183
      %p187 = scmp.eq.s32.totalorder %s28, 0
      %p188 = por %p186, %p187
      %p189 = scmp.ne.s32.totalorder %s181, %s183
      %p190 = scmp.eq.s32.totalorder %s33, 3
      %p191 = por %p189, %p190
      %p192 = scmp.ne.s32.totalorder %s183, %s184
      %p193 = scmp.eq.s32.totalorder %s33, 0
      %p194 = por %p192, %p193
      %p195 = scmp.ne.s32.totalorder %s183, %s184
      %p196 = scmp.eq.s32.totalorder %s34, 3
      %p197 = por %p195, %p196
      %p199 = scmp.ne.s32.totalorder %s184, %s198
      %p200 = scmp.eq.s32.totalorder %s34, 0
      %p201 = por %p199, %p200
      %s203 = sadd.s32 %s202, 1
      %p206 = scmp.eq.s32.totalorder %s28, 3
      %p207 = scmp.ne.s32.totalorder %s202, %s204
      %p208 = scmp.eq.s32.totalorder %s28, 0
      %p209 = por %p207, %p208
      %p210 = scmp.ne.s32.totalorder %s202, %s204
      %p211 = scmp.eq.s32.totalorder %s33, 3
      %p212 = por %p210, %p211
      %p213 = scmp.ne.s32.totalorder %s204, %s205
      %p214 = scmp.eq.s32.totalorder %s33, 0
      %p215 = por %p213, %p214
      %p216 = scmp.ne.s32.totalorder %s204, %s205
      %p217 = scmp.eq.s32.totalorder %s34, 3
      %p218 = por %p216, %p217
      %p220 = scmp.ne.s32.totalorder %s205, %s219
      %p221 = scmp.eq.s32.totalorder %s34, 0
      %p222 = por %p220, %p221
      %s224 = sadd.s32 %s223, 1
      %p227 = scmp.eq.s32.totalorder %s28, 3
      %p228 = scmp.ne.s32.totalorder %s223, %s225
      %p229 = scmp.eq.s32.totalorder %s28, 0
      %p230 = por %p228, %p229
      %p231 = scmp.ne.s32.totalorder %s223, %s225
      %p232 = scmp.eq.s32.totalorder %s33, 3
      %p233 = por %p231, %p232
      %p234 = scmp.ne.s32.totalorder %s225, %s226
      %p235 = scmp.eq.s32.totalorder %s33, 0
      %p236 = por %p234, %p235
      %p237 = scmp.ne.s32.totalorder %s225, %s226
      %p238 = scmp.eq.s32.totalorder %s34, 3
      %p239 = por %p237, %p238
      %p241 = scmp.ne.s32.totalorder %s226, %s240
      %p242 = scmp.eq.s32.totalorder %s34, 0
      %p243 = por %p241, %p242
      %s245 = sadd.s32 %s244, 1
      %p248 = scmp.eq.s32.totalorder %s28, 3
      %p249 = scmp.ne.s32.totalorder %s244, %s246
      %p250 = scmp.eq.s32.totalorder %s28, 0
      %p251 = por %p249, %p250
      %p252 = scmp.ne.s32.totalorder %s244, %s246
      %p253 = scmp.eq.s32.totalorder %s33, 3
      %p254 = por %p252, %p253
      %p255 = scmp.ne.s32.totalorder %s246, %s247
      %p256 = scmp.eq.s32.totalorder %s33, 0
      %p257 = por %p255, %p256
      %p258 = scmp.ne.s32.totalorder %s246, %s247
      %p259 = scmp.eq.s32.totalorder %s34, 3
      %p260 = por %p258, %p259
      %p262 = scmp.ne.s32.totalorder %s247, %s261
      %p263 = scmp.eq.s32.totalorder %s34, 0
      %p264 = por %p262, %p263
      %s266 = sadd.s32 %s265, 1
      %p269 = scmp.eq.s32.totalorder %s28, 3
      %p270 = scmp.ne.s32.totalorder %s265, %s267
      %p271 = scmp.eq.s32.totalorder %s28, 0
      %p272 = por %p270, %p271
      %p273 = scmp.ne.s32.totalorder %s265, %s267
      %p274 = scmp.eq.s32.totalorder %s33, 3
      %p275 = por %p273, %p274
      %p276 = scmp.ne.s32.totalorder %s267, %s268
      %p277 = scmp.eq.s32.totalorder %s33, 0
      %p278 = por %p276, %p277
      %p279 = scmp.ne.s32.totalorder %s267, %s268
      %p280 = scmp.eq.s32.totalorder %s34, 3
      %p281 = por %p279, %p280
      %p283 = scmp.ne.s32.totalorder %s268, %s282
      %p284 = scmp.eq.s32.totalorder %s34, 0
      %p285 = por %p283, %p284
      %s287 = sadd.s32 %s286, 1
      %p290 = scmp.eq.s32.totalorder %s28, 3
      %p291 = scmp.ne.s32.totalorder %s286, %s288
      %p292 = scmp.eq.s32.totalorder %s28, 0
      %p293 = por %p291, %p292
      %p294 = scmp.ne.s32.totalorder %s286, %s288
      %p295 = scmp.eq.s32.totalorder %s33, 3
      %p296 = por %p294, %p295
      %p297 = scmp.ne.s32.totalorder %s288, %s289
      %p298 = scmp.eq.s32.totalorder %s33, 0
      %p299 = por %p297, %p298
      %p300 = scmp.ne.s32.totalorder %s288, %s289
      %p301 = scmp.eq.s32.totalorder %s34, 3
      %p302 = por %p300, %p301
      %p304 = scmp.ne.s32.totalorder %s289, %s303
      %p305 = scmp.eq.s32.totalorder %s34, 0
      %p306 = por %p304, %p305
      %s308 = sadd.s32 %s307, 1
      %p311 = scmp.eq.s32.totalorder %s28, 3
      %p312 = scmp.ne.s32.totalorder %s307, %s309
      %p313 = scmp.eq.s32.totalorder %s28, 0
      %p314 = por %p312, %p313
      %p315 = scmp.ne.s32.totalorder %s307, %s309
      %p316 = scmp.eq.s32.totalorder %s33, 3
      %p317 = por %p315, %p316
      %p318 = scmp.ne.s32.totalorder %s309, %s310
      %p319 = scmp.eq.s32.totalorder %s33, 0
      %p320 = por %p318, %p319
      %p321 = scmp.ne.s32.totalorder %s309, %s310
      %p322 = scmp.eq.s32.totalorder %s34, 3
      %p323 = por %p321, %p322
      %p325 = scmp.ne.s32.totalorder %s310, %s324
      %p326 = scmp.eq.s32.totalorder %s34, 0
      %p327 = por %p325, %p326
      %s328 = ssub.s32 %s35, %s47
      %s329 = ssub.s32 %s36, %s43
      %s330 = sor.u32 %s328, %s329
      %p331 = scmp.eq.s32.totalorder %s330, 0
      %s333 = sadd.s32 %s332, 1
      %s334 = scalar_select %p331, %s332, %s333
      %p337 = pneg %p331
      %p338 = scmp.eq.s32.totalorder %s28, 3
      %p339 = por %p337, %p338
      %p340 = scmp.ne.s32.totalorder %s332, %s335
      %p341 = scmp.eq.s32.totalorder %s28, 0
      %p342 = por %p340, %p341
      %p343 = scmp.ne.s32.totalorder %s332, %s335
      %p344 = scmp.eq.s32.totalorder %s33, 3
      %p345 = por %p343, %p344
      %p346 = scmp.ne.s32.totalorder %s335, %s336
      %p347 = scmp.eq.s32.totalorder %s33, 0
      %p348 = por %p346, %p347
      %p349 = scmp.ne.s32.totalorder %s335, %s336
      %p350 = scmp.eq.s32.totalorder %s34, 3
      %p351 = por %p349, %p350
      %p353 = scmp.ne.s32.totalorder %s336, %s352
      %p354 = scmp.eq.s32.totalorder %s34, 0
      %p355 = por %p353, %p354
      %p356 = scmp.le.s32.totalorder 1, %s28
      %p357 = scmp.lt.s32.totalorder %s28, 5
      %p358 = pnand %p356, %p357
      %p359 = pneg %p358
      // Predicated region
      $region9: #{tpu_custom_call.1} parent=5 // pred_check
        _
      $region10: #{tpu_custom_call.1} parent=5 // pred_check_branch
        %361 = sbr.rel (%p358) target = $region12
      $region11: #{tpu_custom_call.1} parent=5 // pred_region
        %s362 = ssub.s32 %s28, 1
        // Predicated region
        $region13: #{tpu_custom_call.1} parent=11 // pred_check
          %p363 = pneg %p89
        $region14: #{tpu_custom_call.1} parent=11 // pred_check_branch
          %365 = sbr.rel (%p363) target = $region16
        $region15: #{tpu_custom_call.1} parent=11 // pred_region
          %s367 = ssub.s32 512, 512
          %368 = vsyncadd [#allocation12], %s367
          %s369 = sshll.u32 [#allocation11], 4
          %s370 = int_to_ptr.vmem [resolvable:$true] %s369
          %375 = dma.hbm_to_vmem [thread:$0]  %s1, 512, %s370, [#allocation12], 128, 128, 8
        $region16: #{tpu_custom_call.1} parent=11 // pred_fallthru
          _
        // Predicated region
        $region17: #{tpu_custom_call.1} parent=11 // pred_check
          %p376 = pneg %p110
        $region18: #{tpu_custom_call.1} parent=11 // pred_check_branch
          %378 = sbr.rel (%p376) target = $region20
        $region19: #{tpu_custom_call.1} parent=11 // pred_region
          %s380 = ssub.s32 512, 512
          %381 = vsyncadd [#allocation12], %s380
          %s382 = sshll.u32 [#allocation13], 4
          %s383 = int_to_ptr.vmem [resolvable:$true] %s382
          %388 = dma.hbm_to_vmem [thread:$0]  %s2, 512, %s383, [#allocation12], 128, 128, 8
        $region20: #{tpu_custom_call.1} parent=11 // pred_fallthru
          _
        // Predicated region
        $region21: #{tpu_custom_call.1} parent=11 // pred_check
          %p389 = pneg %p131
        $region22: #{tpu_custom_call.1} parent=11 // pred_check_branch
          %391 = sbr.rel (%p389) target = $region24
        $region23: #{tpu_custom_call.1} parent=11 // pred_region
          _
        $region24: #{tpu_custom_call.1} parent=11 // pred_fallthru
          _
        // Predicated region
        $region25: #{tpu_custom_call.1} parent=11 // pred_check
          %p392 = pneg %p152
        $region26: #{tpu_custom_call.1} parent=11 // pred_check_branch
          %394 = sbr.rel (%p392) target = $region28
        $region27: #{tpu_custom_call.1} parent=11 // pred_region
          _
        $region28: #{tpu_custom_call.1} parent=11 // pred_fallthru
          _
        // Predicated region
        $region29: #{tpu_custom_call.1} parent=11 // pred_check
          %p395 = pneg %p173
        $region30: #{tpu_custom_call.1} parent=11 // pred_check_branch
          %397 = sbr.rel (%p395) target = $region32
        $region31: #{tpu_custom_call.1} parent=11 // pred_region
          %s399 = ssub.s32 512, 512
          %400 = vsyncadd [#allocation15], %s399
          %s401 = sshll.u32 [#allocation14], 4
          %s402 = int_to_ptr.vmem [resolvable:$true] %s401
          %407 = dma.hbm_to_vmem [thread:$0]  %s5, 512, %s402, [#allocation15], 128, 128, 8
        $region32: #{tpu_custom_call.1} parent=11 // pred_fallthru
          _
        // Predicated region
        $region33: #{tpu_custom_call.1} parent=11 // pred_check
          %p408 = pneg %p194
        $region34: #{tpu_custom_call.1} parent=11 // pred_check_branch
          %410 = sbr.rel (%p408) target = $region36
        $region35: #{tpu_custom_call.1} parent=11 // pred_region
          _
        $region36: #{tpu_custom_call.1} parent=11 // pred_fallthru
          _
        // Predicated region
        $region37: #{tpu_custom_call.1} parent=11 // pred_check
          %p411 = pneg %p215
        $region38: #{tpu_custom_call.1} parent=11 // pred_check_branch
          %413 = sbr.rel (%p411) target = $region40
        $region39: #{tpu_custom_call.1} parent=11 // pred_region
          %s415 = ssub.s32 16, 16
          %416 = vsyncadd [#allocation15], %s415
          %s418 = sshll.u32 [#allocation16], 4
          %s419 = int_to_ptr.vmem [resolvable:$true] %s418
          %421 = dma.hbm_to_vmem [thread:$0]  %s7, 16, %s419, [#allocation15]
        $region40: #{tpu_custom_call.1} parent=11 // pred_fallthru
          _
        // Predicated region
        $region41: #{tpu_custom_call.1} parent=11 // pred_check
          %p422 = pneg %p236
        $region42: #{tpu_custom_call.1} parent=11 // pred_check_branch
          %424 = sbr.rel (%p422) target = $region44
        $region43: #{tpu_custom_call.1} parent=11 // pred_region
          %s426 = ssub.s32 256, 256
          %427 = vsyncadd [#allocation18], %s426
          %s428 = sshll.u32 [#allocation17], 4
          %s429 = int_to_ptr.vmem [resolvable:$true] %s428
          %434 = dma.hbm_to_vmem [thread:$0]  %s8, 256, %s429, [#allocation18], 128, 128, 8
        $region44: #{tpu_custom_call.1} parent=11 // pred_fallthru
          _
        // Predicated region
        $region45: #{tpu_custom_call.1} parent=11 // pred_check
          %p435 = pneg %p257
        $region46: #{tpu_custom_call.1} parent=11 // pred_check_branch
          %437 = sbr.rel (%p435) target = $region48
        $region47: #{tpu_custom_call.1} parent=11 // pred_region
          %s439 = ssub.s32 16, 16
          %440 = vsyncadd [#allocation18], %s439
          %s442 = sshll.u32 [#allocation19], 4
          %s443 = int_to_ptr.vmem [resolvable:$true] %s442
          %445 = dma.hbm_to_vmem [thread:$0]  %s9, 16, %s443, [#allocation18]
        $region48: #{tpu_custom_call.1} parent=11 // pred_fallthru
          _
        // Predicated region
        $region49: #{tpu_custom_call.1} parent=11 // pred_check
          %p446 = pneg %p278
        $region50: #{tpu_custom_call.1} parent=11 // pred_check_branch
          %448 = sbr.rel (%p446) target = $region52
        $region51: #{tpu_custom_call.1} parent=11 // pred_region
          _
        $region52: #{tpu_custom_call.1} parent=11 // pred_fallthru
          _
        // Predicated region
        $region53: #{tpu_custom_call.1} parent=11 // pred_check
          %p449 = pneg %p299
        $region54: #{tpu_custom_call.1} parent=11 // pred_check_branch
          %451 = sbr.rel (%p449) target = $region56
        $region55: #{tpu_custom_call.1} parent=11 // pred_region
          _
        $region56: #{tpu_custom_call.1} parent=11 // pred_fallthru
          _
        // Predicated region
        $region57: #{tpu_custom_call.1} parent=11 // pred_check
          %p452 = pneg %p320
        $region58: #{tpu_custom_call.1} parent=11 // pred_check_branch
          %454 = sbr.rel (%p452) target = $region60
        $region59: #{tpu_custom_call.1} parent=11 // pred_region
          _
        $region60: #{tpu_custom_call.1} parent=11 // pred_fallthru
          _
      $region12: #{tpu_custom_call.1} parent=5 // pred_fallthru
        _
      %p455 = scmp.lt.s32.totalorder %s28, 4
      // Predicated region
      $region61: #{tpu_custom_call.1} parent=5 // pred_check
        %p456 = pneg %p455
      $region62: #{tpu_custom_call.1} parent=5 // pred_check_branch
        %458 = sbr.rel (%p456) target = $region64
      $region63: #{tpu_custom_call.1} parent=5 // pred_region
        // Predicated region
        $region65: #{tpu_custom_call.1} parent=63 // pred_check
          %p459 = pneg %p62
        $region66: #{tpu_custom_call.1} parent=63 // pred_check_branch
          %461 = sbr.rel (%p459) target = $region68
        $region67: #{tpu_custom_call.1} parent=63 // pred_region
          %s462 = sand.u32 %s52, 1
          %s463 = scalar_lea.sflag [#allocation9], %s462
          %s464 = sand.u32 %s52, 1
          %s465 = smul.addr %s464, 8
          %s466 = scalar_lea.vmem [#allocation8], %s465
          %s468 = ssub.s32 128, 128
          %469 = vsyncadd %s463, %s468
          %s470 = smul.addr %s35, 2
          %s471 = sadd.s32 %s36, %s470
          %s472 = smul.addr %s471, 128
          %s473 = scalar_lea.hbm %s0, %s472
          %s475 = sshll.u32 %s466, 4
          %s476 = int_to_ptr.vmem [resolvable:$true] %s475
          %478 = dma.hbm_to_vmem [thread:$0]  %s473, 128, %s476, %s463
        $region68: #{tpu_custom_call.1} parent=63 // pred_fallthru
          _
      $region64: #{tpu_custom_call.1} parent=5 // pred_fallthru
        _
      %p479 = scmp.le.s32.totalorder 1, %s28
      %p480 = scmp.lt.s32.totalorder %s28, 5
      %p481 = pnand %p479, %p480
      %p482 = pneg %p481
      // Predicated region
      $region69: #{tpu_custom_call.1} parent=5 // pred_check
        _
      $region70: #{tpu_custom_call.1} parent=5 // pred_check_branch
        %484 = sbr.rel (%p481) target = $region72
      $region71: #{tpu_custom_call.1} parent=5 // pred_region
        %s485 = ssub.s32 %s28, 1
        %s486 = sand.u32 %s55, 1
        %s487 = scalar_lea.sflag [#allocation9], %s486
        %s488 = sand.u32 %s55, 1
        %s489 = smul.addr %s488, 8
        %s490 = scalar_lea.vmem [#allocation8], %s489
        // Predicated region
        $region73: #{tpu_custom_call.1} parent=71 // pred_check
          %p491 = pneg %p68
        $region74: #{tpu_custom_call.1} parent=71 // pred_check_branch
          %493 = sbr.rel (%p491) target = $region76
        $region75: #{tpu_custom_call.1} parent=71 // pred_region
          %494 = dma.done %s487, 128
        $region76: #{tpu_custom_call.1} parent=71 // pred_fallthru
          _
        // Predicated region
        $region77: #{tpu_custom_call.1} parent=71 // pred_check
          %p495 = pneg %p89
        $region78: #{tpu_custom_call.1} parent=71 // pred_check_branch
          %497 = sbr.rel (%p495) target = $region80
        $region79: #{tpu_custom_call.1} parent=71 // pred_region
          %498 = dma.done [#allocation12], 512
        $region80: #{tpu_custom_call.1} parent=71 // pred_fallthru
          _
        // Predicated region
        $region81: #{tpu_custom_call.1} parent=71 // pred_check
          %p499 = pneg %p110
        $region82: #{tpu_custom_call.1} parent=71 // pred_check_branch
          %501 = sbr.rel (%p499) target = $region84
        $region83: #{tpu_custom_call.1} parent=71 // pred_region
          %502 = dma.done [#allocation12], 512
        $region84: #{tpu_custom_call.1} parent=71 // pred_fallthru
          _
        // Predicated region
        $region85: #{tpu_custom_call.1} parent=71 // pred_check
          %p503 = pneg %p173
        $region86: #{tpu_custom_call.1} parent=71 // pred_check_branch
          %505 = sbr.rel (%p503) target = $region88
        $region87: #{tpu_custom_call.1} parent=71 // pred_region
          %506 = dma.done [#allocation15], 512
        $region88: #{tpu_custom_call.1} parent=71 // pred_fallthru
          _
        // Predicated region
        $region89: #{tpu_custom_call.1} parent=71 // pred_check
          %p507 = pneg %p215
        $region90: #{tpu_custom_call.1} parent=71 // pred_check_branch
          %509 = sbr.rel (%p507) target = $region92
        $region91: #{tpu_custom_call.1} parent=71 // pred_region
          %510 = dma.done [#allocation15], 16
        $region92: #{tpu_custom_call.1} parent=71 // pred_fallthru
          _
        // Predicated region
        $region93: #{tpu_custom_call.1} parent=71 // pred_check
          %p511 = pneg %p236
        $region94: #{tpu_custom_call.1} parent=71 // pred_check_branch
          %513 = sbr.rel (%p511) target = $region96
        $region95: #{tpu_custom_call.1} parent=71 // pred_region
          %514 = dma.done [#allocation18], 256
        $region96: #{tpu_custom_call.1} parent=71 // pred_fallthru
          _
        // Predicated region
        $region97: #{tpu_custom_call.1} parent=71 // pred_check
          %p515 = pneg %p257
        $region98: #{tpu_custom_call.1} parent=71 // pred_check_branch
          %517 = sbr.rel (%p515) target = $region100
        $region99: #{tpu_custom_call.1} parent=71 // pred_region
          %518 = dma.done [#allocation18], 16
        $region100: #{tpu_custom_call.1} parent=71 // pred_fallthru
          _
        %s519 = sand.u32 %s55, 1
        %s520 = scalar_lea.sflag [#allocation9], %s519
        %s521 = sand.u32 %s55, 1
        %s522 = smul.addr %s521, 8
        %s523 = scalar_lea.vmem [#allocation8], %s522
        %p524 = pneg %p68
        %p525 = pneg %p65
        %p526 = pneg %p89
        %p527 = pneg %p86
        %p528 = pneg %p110
        %p529 = pneg %p107
        %p530 = pneg %p131
        %p531 = pneg %p128
        %p532 = pneg %p152
        %p533 = pneg %p149
        %p534 = pneg %p173
        %p535 = pneg %p170
        %p536 = pneg %p194
        %p537 = pneg %p191
        %p538 = pneg %p215
        %p539 = pneg %p212
        %p540 = pneg %p236
        %p541 = pneg %p233
        %p542 = pneg %p257
        %p543 = pneg %p254
        %p544 = pneg %p278
        %p545 = pneg %p275
        %p546 = pneg %p299
        %p547 = pneg %p296
        %p548 = pneg %p320
        %p549 = pneg %p317
        %p550 = pneg %p348
        %p551 = pneg %p345
        %s552 = sand.u32 %s335, 1
        %s553 = scalar_lea.sflag [#allocation10], %s552
        %s554 = sand.u32 %s335, 1
        %s555 = smul.addr %s554, 8
        %s556 = scalar_lea.vmem [#allocation20], %s555
        %p557 = scmp.eq.s32.totalorder %s38, 0
        // Predicated region
        $region101: #{tpu_custom_call.1} parent=71 // pred_check
          %p558 = pneg %p557
        $region102: #{tpu_custom_call.1} parent=71 // pred_check_branch
          %560 = sbr.rel (%p558) target = $region104
        $region103: #{tpu_custom_call.1} parent=71 // pred_region
          %vm561 = vcmask 261120
          %562 = vst.msk [vmem:[#allocation2] sm:$0xff] %vm561, 0.0
          %563 = vst.msk [vmem:[#allocation2 + $0x8] sm:$0xff] %vm561, 0.0
          %vm564 = vcmask 253952
          %565 = vst.msk [vmem:[#allocation3] sm:$0x1] %vm564, 0.0
        $region104: #{tpu_custom_call.1} parent=71 // pred_fallthru
          _
        %v566 = vld [vmem:[%s490] sm:$0xff]
        %v567 = vld [vmem:[#allocation11] sm:$0xff]
        %v568 = vld [vmem:[#allocation11 + $0x8] sm:$0xff]
        %v569 = vld [vmem:[#allocation11 + $0x10] sm:$0xff]
        %v570 = vld [vmem:[#allocation11 + $0x18] sm:$0xff]
        %vm571 = vcmask 261120
        %v573 = vsel %vm571, %v566, 0
        %575 = vmatprep.subr.mxu0 0.0
        %576 = vmatpush1.msra.mxu0 %v567
        %577 = vmatprep.subr.mxu0 0.0
        %578 = vmatpush1.msra.mxu0 %v568
        %579 = vmatprep.subr.mxu0 0.0
        %580 = vmatpush1.msra.mxu0 %v569
        %581 = vmatprep.subr.mxu0 0.0
        %582 = vmatpush1.msra.mxu0 %v570
        %583 = vmatprep.subr.mxu0 0.0
        %584 = vmatpush1.msra.mxu0 0.0
        %585 = vmatprep.subr.mxu0 0.0
        %586 = vmatpush1.msra.mxu0 0.0
        %587 = vmatprep.subr.mxu0 0.0
        %588 = vmatpush1.msra.mxu0 0.0
        %589 = vmatprep.subr.mxu0 0.0
        %590 = vmatpush1.msra.mxu0 0.0
        %591 = vmatprep.subr.mxu0 0.0
        %592 = vmatpush1.msra.mxu0 0.0
        %593 = vmatprep.subr.mxu0 0.0
        %594 = vmatpush1.msra.mxu0 0.0
        %595 = vmatprep.subr.mxu0 0.0
        %596 = vmatpush1.msra.mxu0 0.0
        %597 = vmatprep.subr.mxu0 0.0
        %598 = vmatpush1.msra.mxu0 0.0
        %599 = vmatprep.subr.mxu0 0.0
        %600 = vmatpush1.msra.mxu0 0.0
        %601 = vmatprep.subr.mxu0 0.0
        %602 = vmatpush1.msra.mxu0 0.0
        %603 = vmatprep.subr.mxu0 0.0
        %604 = vmatpush1.msra.mxu0 0.0
        %605 = vmatprep.subr.mxu0 0.0
        %606 = vmatpush1.msra.mxu0 0.0
        %607 = vmatprep.subr.mxu0 0.0
        %608 = vmatpush1.msra.mxu0 0.0
        %609 = vmatprep.subr.mxu0 0.0
        %610 = vmatpush1.msra.mxu0 0.0
        %611 = vmatprep.subr.mxu0 0.0
        %612 = vmatpush1.msra.mxu0 0.0
        %613 = vmatprep.subr.mxu0 0.0
        %614 = vmatpush1.msra.mxu0 0.0
        %615 = vmatprep.subr.mxu0 0.0
        %616 = vmatpush1.msra.mxu0 0.0
        %617 = vmatprep.subr.mxu0 0.0
        %618 = vmatpush1.msra.mxu0 0.0
        %619 = vmatprep.subr.mxu0 0.0
        %620 = vmatpush1.msra.mxu0 0.0
        %621 = vmatprep.subr.mxu0 0.0
        %622 = vmatpush1.msra.mxu0 0.0
        %623 = vmatprep.subr.mxu0 0.0
        %624 = vmatpush1.msra.mxu0 0.0
        %625 = vmatprep.subr.mxu0 0.0
        %626 = vmatpush1.msra.mxu0 0.0
        %627 = vmatprep.subr.mxu0 0.0
        %628 = vmatpush1.msra.mxu0 0.0
        %629 = vmatprep.subr.mxu0 0.0
        %630 = vmatpush1.msra.mxu0 0.0
        %631 = vmatprep.subr.mxu0 0.0
        %632 = vmatpush1.msra.mxu0 0.0
        %633 = vmatprep.subr.mxu0 0.0
        %634 = vmatpush1.msra.mxu0 0.0
        %635 = vmatprep.subr.mxu0 0.0
        %636 = vmatpush1.msra.mxu0 0.0
        %637 = vmatprep.subr.mxu0 0.0
        %638 = vmatpush1.msra.mxu0 0.0
        %639 = vmatprep.mubr.f32.mxu0 0.0
        %640 = vmatmul.mubr.f32.gmra.mrb[0].mxu0 %v573
        %v641 = vpop.f32.mrb[0].mxu0
        %v642 = vadd.f32 0.0, %v641
        %v643 = vpop.f32.mrb[0].mxu0
        %644 = vdwg.mxu0
        %v645 = vld [vmem:[#allocation13] sm:$0xff]
        %v646 = vld [vmem:[#allocation13 + $0x8] sm:$0xff]
        %v647 = vld [vmem:[#allocation13 + $0x10] sm:$0xff]
        %v648 = vld [vmem:[#allocation13 + $0x18] sm:$0xff]
        %649 = vmatprep.subr.mxu0 0.0
        %650 = vmatpush1.msra.mxu0 %v645
        %651 = vmatprep.subr.mxu0 0.0
        %652 = vmatpush1.msra.mxu0 %v646
        %653 = vmatprep.subr.mxu0 0.0
        %654 = vmatpush1.msra.mxu0 %v647
        %655 = vmatprep.subr.mxu0 0.0
        %656 = vmatpush1.msra.mxu0 %v648
        %657 = vmatprep.subr.mxu0 0.0
        %658 = vmatpush1.msra.mxu0 0.0
        %659 = vmatprep.subr.mxu0 0.0
        %660 = vmatpush1.msra.mxu0 0.0
        %661 = vmatprep.subr.mxu0 0.0
        %662 = vmatpush1.msra.mxu0 0.0
        %663 = vmatprep.subr.mxu0 0.0
        %664 = vmatpush1.msra.mxu0 0.0
        %665 = vmatprep.subr.mxu0 0.0
        %666 = vmatpush1.msra.mxu0 0.0
        %667 = vmatprep.subr.mxu0 0.0
        %668 = vmatpush1.msra.mxu0 0.0
        %669 = vmatprep.subr.mxu0 0.0
        %670 = vmatpush1.msra.mxu0 0.0
        %671 = vmatprep.subr.mxu0 0.0
        %672 = vmatpush1.msra.mxu0 0.0
        %673 = vmatprep.subr.mxu0 0.0
        %674 = vmatpush1.msra.mxu0 0.0
        %675 = vmatprep.subr.mxu0 0.0
        %676 = vmatpush1.msra.mxu0 0.0
        %677 = vmatprep.subr.mxu0 0.0
        %678 = vmatpush1.msra.mxu0 0.0
        %679 = vmatprep.subr.mxu0 0.0
        %680 = vmatpush1.msra.mxu0 0.0
        %681 = vmatprep.subr.mxu0 0.0
        %682 = vmatpush1.msra.mxu0 0.0
        %683 = vmatprep.subr.mxu0 0.0
        %684 = vmatpush1.msra.mxu0 0.0
        %685 = vmatprep.subr.mxu0 0.0
        %686 = vmatpush1.msra.mxu0 0.0
        %687 = vmatprep.subr.mxu0 0.0
        %688 = vmatpush1.msra.mxu0 0.0
        %689 = vmatprep.subr.mxu0 0.0
        %690 = vmatpush1.msra.mxu0 0.0
        %691 = vmatprep.subr.mxu0 0.0
        %692 = vmatpush1.msra.mxu0 0.0
        %693 = vmatprep.subr.mxu0 0.0
        %694 = vmatpush1.msra.mxu0 0.0
        %695 = vmatprep.subr.mxu0 0.0
        %696 = vmatpush1.msra.mxu0 0.0
        %697 = vmatprep.subr.mxu0 0.0
        %698 = vmatpush1.msra.mxu0 0.0
        %699 = vmatprep.subr.mxu0 0.0
        %700 = vmatpush1.msra.mxu0 0.0
        %701 = vmatprep.subr.mxu0 0.0
        %702 = vmatpush1.msra.mxu0 0.0
        %703 = vmatprep.subr.mxu0 0.0
        %704 = vmatpush1.msra.mxu0 0.0
        %705 = vmatprep.subr.mxu0 0.0
        %706 = vmatpush1.msra.mxu0 0.0
        %707 = vmatprep.subr.mxu0 0.0
        %708 = vmatpush1.msra.mxu0 0.0
        %709 = vmatprep.subr.mxu0 0.0
        %710 = vmatpush1.msra.mxu0 0.0
        %711 = vmatprep.subr.mxu0 0.0
        %712 = vmatpush1.msra.mxu0 0.0
        %713 = vmatprep.mubr.f32.mxu0 0.0
        %714 = vmatmul.mubr.f32.gmra.mrb[0].mxu0 %v573
        %v715 = vpop.f32.mrb[0].mxu0
        %v716 = vadd.f32 0.0, %v715
        %v717 = vpop.f32.mrb[0].mxu0
        %718 = vdwg.mxu0
        %v719 = vrot.slane %v642, 7
        %v720 = vlaneseq
        %v721 = vshrl.u32 %v720, 7
        %vm722 = vcmp.eq.s32.totalorder %v721, 0
        %v723 = vld [vmem:[#allocation3] sm:$0x1]
        %v725 = vlaneseq
        %v726 = vshrl.u32 %v725, 7
        %v727 = vsub.s32 0, %v726
        %v728 = vrot.slane %v723, %v727
        %v730 = vsel %vm722, %v728, %v719
        %v731 = vld [vmem:[%s3] sm:$0x1]
        %v732 = vlaneseq
        %v733 = vshrl.u32 %v732, 7
        %v734 = vsub.s32 0, %v733
        %v735 = vrot.slane %v731, %v734
        %v736 = vmul.f32 %v730, %v735
        %v737 = vld [vmem:[%s3 + $0x1] sm:$0x1]
        %v738 = vlaneseq
        %v739 = vshrl.u32 %v738, 7
        %v740 = vsub.s32 0, %v739
        %v741 = vrot.slane %v737, %v740
        %v742 = vmul.f32 %v642, %v741
        %v743 = vadd.f32 %v736, %v742
        %v744 = vld [vmem:[%s4] sm:$0x1]
        %v746 = vlaneseq
        %v747 = vshrl.u32 %v746, 7
        %v748 = vsub.s32 0, %v747
        %v749 = vrot.slane %v744, %v748
        %v751 = vadd.f32 %v743, %v749
        %v752 = vxor.u32 %v751, 2147483648
        %v753 = vmul.f32 %v752, 1.442695
        %v754 = vpow.pop %v753
        %v755 = vadd.f32 %v754, 1.0
        %v756 = vrcp.pop %v755
        %v757 = vmul.f32 1.0, %v756
        %v758 = vmul.f32 %v751, %v757
        %vm759 = vcmask 261127
        %760 = vst.msk [vmem:[#allocation3 - $0x7] sm:$0x80] %vm759, %v642
        %v761 = vld [vmem:[#allocation14] sm:$0xff]
        %v762 = vld [vmem:[#allocation14 + $0x8] sm:$0xff]
        %v763 = vld [vmem:[#allocation14 + $0x10] sm:$0xff]
        %v764 = vld [vmem:[#allocation14 + $0x18] sm:$0xff]
        %v766 = vsel %vm571, %v758, 0
        %768 = vmatprep.subr.mxu0 0.0
        %769 = vmatpush1.msra.mxu0 %v761
        %770 = vmatprep.subr.mxu0 0.0
        %771 = vmatpush1.msra.mxu0 %v762
        %772 = vmatprep.subr.mxu0 0.0
        %773 = vmatpush1.msra.mxu0 %v763
        %774 = vmatprep.subr.mxu0 0.0
        %775 = vmatpush1.msra.mxu0 %v764
        %776 = vmatprep.subr.mxu0 0.0
        %777 = vmatpush1.msra.mxu0 0.0
        %778 = vmatprep.subr.mxu0 0.0
        %779 = vmatpush1.msra.mxu0 0.0
        %780 = vmatprep.subr.mxu0 0.0
        %781 = vmatpush1.msra.mxu0 0.0
        %782 = vmatprep.subr.mxu0 0.0
        %783 = vmatpush1.msra.mxu0 0.0
        %784 = vmatprep.subr.mxu0 0.0
        %785 = vmatpush1.msra.mxu0 0.0
        %786 = vmatprep.subr.mxu0 0.0
        %787 = vmatpush1.msra.mxu0 0.0
        %788 = vmatprep.subr.mxu0 0.0
        %789 = vmatpush1.msra.mxu0 0.0
        %790 = vmatprep.subr.mxu0 0.0
        %791 = vmatpush1.msra.mxu0 0.0
        %792 = vmatprep.subr.mxu0 0.0
        %793 = vmatpush1.msra.mxu0 0.0
        %794 = vmatprep.subr.mxu0 0.0
        %795 = vmatpush1.msra.mxu0 0.0
        %796 = vmatprep.subr.mxu0 0.0
        %797 = vmatpush1.msra.mxu0 0.0
        %798 = vmatprep.subr.mxu0 0.0
        %799 = vmatpush1.msra.mxu0 0.0
        %800 = vmatprep.subr.mxu0 0.0
        %801 = vmatpush1.msra.mxu0 0.0
        %802 = vmatprep.subr.mxu0 0.0
        %803 = vmatpush1.msra.mxu0 0.0
        %804 = vmatprep.subr.mxu0 0.0
        %805 = vmatpush1.msra.mxu0 0.0
        %806 = vmatprep.subr.mxu0 0.0
        %807 = vmatpush1.msra.mxu0 0.0
        %808 = vmatprep.subr.mxu0 0.0
        %809 = vmatpush1.msra.mxu0 0.0
        %810 = vmatprep.subr.mxu0 0.0
        %811 = vmatpush1.msra.mxu0 0.0
        %812 = vmatprep.subr.mxu0 0.0
        %813 = vmatpush1.msra.mxu0 0.0
        %814 = vmatprep.subr.mxu0 0.0
        %815 = vmatpush1.msra.mxu0 0.0
        %816 = vmatprep.subr.mxu0 0.0
        %817 = vmatpush1.msra.mxu0 0.0
        %818 = vmatprep.subr.mxu0 0.0
        %819 = vmatpush1.msra.mxu0 0.0
        %820 = vmatprep.subr.mxu0 0.0
        %821 = vmatpush1.msra.mxu0 0.0
        %822 = vmatprep.subr.mxu0 0.0
        %823 = vmatpush1.msra.mxu0 0.0
        %824 = vmatprep.subr.mxu0 0.0
        %825 = vmatpush1.msra.mxu0 0.0
        %826 = vmatprep.subr.mxu0 0.0
        %827 = vmatpush1.msra.mxu0 0.0
        %828 = vmatprep.subr.mxu0 0.0
        %829 = vmatpush1.msra.mxu0 0.0
        %830 = vmatprep.subr.mxu0 0.0
        %831 = vmatpush1.msra.mxu0 0.0
        %832 = vmatprep.mubr.f32.mxu0 0.0
        %833 = vmatmul.mubr.f32.gmra.mrb[0].mxu0 %v766
        %v834 = vpop.f32.mrb[0].mxu0
        %v835 = vadd.f32 0.0, %v834
        %v836 = vpop.f32.mrb[0].mxu0
        %837 = vdwg.mxu0
        %838 = vst [vmem:[#allocation6] sm:$0xff] %v835
        %v839 = vld [vmem:[%s6] sm:$0x3]
        %v840 = vld [vmem:[#allocation16] sm:$0x1]
        %v842 = vlaneseq
        %v843 = vshrl.u32 %v842, 7
        %v844 = vsub.s32 0, %v843
        %v845 = vrot.slane %v840, %v844
        %vm847 = vcmask 15360
        %v849 = vsel %vm847, %v835, 0
        %vm851 = vcmask 1041408
        %v853 = vsel %vm851, %v839, 0
        %855 = vmatprep.subr.mxu0 0.0
        %856 = vmatpush1.msra.mxu0 %v853
        %857 = vmatprep.subr.mxu0 0.0
        %858 = vmatpush1.msra.mxu0 0.0
        %859 = vmatprep.subr.mxu0 0.0
        %860 = vmatpush1.msra.mxu0 0.0
        %861 = vmatprep.subr.mxu0 0.0
        %862 = vmatpush1.msra.mxu0 0.0
        %863 = vmatprep.subr.mxu0 0.0
        %864 = vmatpush1.msra.mxu0 0.0
        %865 = vmatprep.subr.mxu0 0.0
        %866 = vmatpush1.msra.mxu0 0.0
        %867 = vmatprep.subr.mxu0 0.0
        %868 = vmatpush1.msra.mxu0 0.0
        %869 = vmatprep.subr.mxu0 0.0
        %870 = vmatpush1.msra.mxu0 0.0
        %871 = vmatprep.subr.mxu0 0.0
        %872 = vmatpush1.msra.mxu0 0.0
        %873 = vmatprep.subr.mxu0 0.0
        %874 = vmatpush1.msra.mxu0 0.0
        %875 = vmatprep.subr.mxu0 0.0
        %876 = vmatpush1.msra.mxu0 0.0
        %877 = vmatprep.subr.mxu0 0.0
        %878 = vmatpush1.msra.mxu0 0.0
        %879 = vmatprep.subr.mxu0 0.0
        %880 = vmatpush1.msra.mxu0 0.0
        %881 = vmatprep.subr.mxu0 0.0
        %882 = vmatpush1.msra.mxu0 0.0
        %883 = vmatprep.subr.mxu0 0.0
        %884 = vmatpush1.msra.mxu0 0.0
        %885 = vmatprep.subr.mxu0 0.0
        %886 = vmatpush1.msra.mxu0 0.0
        %887 = vmatprep.subr.mxu0 0.0
        %888 = vmatpush1.msra.mxu0 0.0
        %889 = vmatprep.subr.mxu0 0.0
        %890 = vmatpush1.msra.mxu0 0.0
        %891 = vmatprep.subr.mxu0 0.0
        %892 = vmatpush1.msra.mxu0 0.0
        %893 = vmatprep.subr.mxu0 0.0
        %894 = vmatpush1.msra.mxu0 0.0
        %895 = vmatprep.subr.mxu0 0.0
        %896 = vmatpush1.msra.mxu0 0.0
        %897 = vmatprep.subr.mxu0 0.0
        %898 = vmatpush1.msra.mxu0 0.0
        %899 = vmatprep.subr.mxu0 0.0
        %900 = vmatpush1.msra.mxu0 0.0
        %901 = vmatprep.subr.mxu0 0.0
        %902 = vmatpush1.msra.mxu0 0.0
        %903 = vmatprep.subr.mxu0 0.0
        %904 = vmatpush1.msra.mxu0 0.0
        %905 = vmatprep.subr.mxu0 0.0
        %906 = vmatpush1.msra.mxu0 0.0
        %907 = vmatprep.subr.mxu0 0.0
        %908 = vmatpush1.msra.mxu0 0.0
        %909 = vmatprep.subr.mxu0 0.0
        %910 = vmatpush1.msra.mxu0 0.0
        %911 = vmatprep.subr.mxu0 0.0
        %912 = vmatpush1.msra.mxu0 0.0
        %913 = vmatprep.subr.mxu0 0.0
        %914 = vmatpush1.msra.mxu0 0.0
        %915 = vmatprep.subr.mxu0 0.0
        %916 = vmatpush1.msra.mxu0 0.0
        %917 = vmatprep.subr.mxu0 0.0
        %918 = vmatpush1.msra.mxu0 0.0
        %919 = vmatprep.mubr.f32.mxu0 0.0
        %920 = vmatmul.mubr.f32.gmra.mrb[0].mxu0 %v849
        %v921 = vpop.f32.mrb[0].mxu0
        %v922 = vadd.f32 %v845, %v921
        %v923 = vpop.f32.mrb[0].mxu0
        %924 = vdwg.mxu0
        %v925 = vmax.f32 %v922, 0.0
        %vm926 = vcmp.ne.f32.partialorder %v922, %v922
        %v927 = vadd.f32 %v922, 0.0
        %v928 = vand.u32 2147483647, %v922
        %v929 = vsub.f32 0.0, %v928
        %v930 = vmul.f32 %v929, 1.442695
        %v931 = vpow.pop %v930
        %v932 = vadd.f32 %v931, 1.0
        %v933 = vlog2.pop %v932
        %v934 = vmul.f32 %v933, 0.6931472
        %v935 = vmul.f32 -0.5, %v931
        %v936 = vadd.f32 %v935, 1.0
        %v937 = vmul.f32 %v936, %v931
        %v938 = vand.u32 2147483647, %v931
        %vm939 = vcmp.lt.f32.partialorder %v938, 0.0004427343
        %v940 = vsel %vm939, %v937, %v934
        %v941 = vadd.f32 %v925, %v940
        %v942 = vsel %vm926, %v927, %v941
        %943 = vst.msk [vmem:[#allocation4] sm:$0xff] %vm571, %v942
        %v944 = vmul.f32 %v942, %v758
        %945 = vst.msk [vmem:[#allocation5] sm:$0xff] %vm571, %v944
        %v946 = vld [vmem:[#allocation17] sm:$0xff]
        %v947 = vld [vmem:[#allocation17 + $0x8] sm:$0xff]
        %v948 = vld [vmem:[#allocation2] sm:$0xff]
        %v949 = vld [vmem:[#allocation2 + $0x8] sm:$0xff]
        %v950 = vld [vmem:[#allocation4] sm:$0xff]
        %v951 = vld [vmem:[#allocation5] sm:$0xff]
        %v952 = vld [vmem:[#allocation6] sm:$0xff]
        %953 = vxpose.xlu0.b32.start [1/16] %v952, 128
        %954 = vxpose.xlu0.b32.cont [2/16] 0.0, 128
        %955 = vxpose.xlu0.b32.cont [3/16] 0.0, 128
        %956 = vxpose.xlu0.b32.cont [4/16] 0.0, 128
        %957 = vxpose.xlu0.b32.cont [5/16] 0.0, 128
        %958 = vxpose.xlu0.b32.cont [6/16] 0.0, 128
        %959 = vxpose.xlu0.b32.cont [7/16] 0.0, 128
        %960 = vxpose.xlu0.b32.cont [8/16] 0.0, 128
        %961 = vxpose.xlu0.b32.cont [9/16] 0.0, 128
        %962 = vxpose.xlu0.b32.cont [10/16] 0.0, 128
        %963 = vxpose.xlu0.b32.cont [11/16] 0.0, 128
        %964 = vxpose.xlu0.b32.cont [12/16] 0.0, 128
        %965 = vxpose.xlu0.b32.cont [13/16] 0.0, 128
        %966 = vxpose.xlu0.b32.cont [14/16] 0.0, 128
        %967 = vxpose.xlu0.b32.cont [15/16] 0.0, 128
        %968 = vxpose.xlu0.b32.end [16/16] 0.0, 128
        %v969 = vpop.trf.xlu0
        %v970 = vpop.trf.xlu0
        %v971 = vpop.trf.xlu0
        %v972 = vpop.trf.xlu0
        %v973 = vpop.trf.xlu0
        %v974 = vpop.trf.xlu0
        %v975 = vpop.trf.xlu0
        %v976 = vpop.trf.xlu0
        %v977 = vpop.trf.xlu0
        %v978 = vpop.trf.xlu0
        %v979 = vpop.trf.xlu0
        %v980 = vpop.trf.xlu0
        %v981 = vpop.trf.xlu0
        %v982 = vpop.trf.xlu0
        %v983 = vpop.trf.xlu0
        %v984 = vpop.trf.xlu0
        %v985 = vlaneseq
        %v986 = vshrl.u32 %v985, 7
        %v987 = vsub.s32 0, %v986
        %v988 = vrot.slane %v950, %v987
        %v989 = vmul.f32 %v988, %v946
        %v990 = vmul.f32 %v988, %v947
        %v991 = vmul.f32 %v989, 1.442695
        %v992 = vpow.pop %v991
        %v993 = vmul.f32 %v990, 1.442695
        %v994 = vpow.pop %v993
        %v995 = vmul.f32 %v992, %v948
        %v996 = vmul.f32 %v994, %v949
        %v997 = vlaneseq
        %v998 = vshrl.u32 %v997, 7
        %v999 = vsub.s32 0, %v998
        %v1000 = vrot.slane %v951, %v999
        %1002 = vset.pattern.permute.xlu0 0
        %1003 = vperm.xlu0 %1002, %v969
        %v1004 = vpop.permute.xlu0 %1003
        %1007 = vset.pattern.permute.xlu0 0
        %1008 = vperm.xlu0 %1007, %v970
        %v1009 = vpop.permute.xlu0 %1008
        %1012 = vset.pattern.permute.xlu0 0
        %1013 = vperm.xlu0 %1012, %v971
        %v1014 = vpop.permute.xlu0 %1013
        %v1016 = vmul.f32 %v1000, %v1004
        %v1017 = vmul.f32 %v1000, %v1009
        %v1018 = vmul.f32 %v1000, %v1014
        %vm1022 = vcmask 1045504
        %v1023 = vrot.slane %v1016, 2
        %v1024 = vrot.slane %v1017, 2
        %v1025 = vsel %vm1022, %v1023, %v1024
        %v1026 = vrot.slane %v1018, 2
        %v1027 = vsel %vm1022, %v1024, %v1026
        %v1030 = vadd.f32 %v995, %v1025
        %v1031 = vadd.f32 %v996, %v1027
        %1033 = vrot.lane.b32.xlu0 %v952, 110
        %v1034 = vpop.permute.xlu0 %1033
        %vm1035 = vcmask 130048
        %v1036 = vsel %vm1035, %v1034, 0
        %1038 = vmatprep.subr.mxu0 0.0
        %1039 = vmatpush1.msra.mxu0 %v1030
        %1040 = vmatprep.subr.mxu0 0.0
        %1041 = vmatpush1.msra.mxu0 %v1031
        %1042 = vmatprep.subr.mxu0 0.0
        %1043 = vmatpush1.msra.mxu0 0.0
        %1044 = vmatprep.subr.mxu0 0.0
        %1045 = vmatpush1.msra.mxu0 0.0
        %1046 = vmatprep.subr.mxu0 0.0
        %1047 = vmatpush1.msra.mxu0 0.0
        %1048 = vmatprep.subr.mxu0 0.0
        %1049 = vmatpush1.msra.mxu0 0.0
        %1050 = vmatprep.subr.mxu0 0.0
        %1051 = vmatpush1.msra.mxu0 0.0
        %1052 = vmatprep.subr.mxu0 0.0
        %1053 = vmatpush1.msra.mxu0 0.0
        %1054 = vmatprep.subr.mxu0 0.0
        %1055 = vmatpush1.msra.mxu0 0.0
        %1056 = vmatprep.subr.mxu0 0.0
        %1057 = vmatpush1.msra.mxu0 0.0
        %1058 = vmatprep.subr.mxu0 0.0
        %1059 = vmatpush1.msra.mxu0 0.0
        %1060 = vmatprep.subr.mxu0 0.0
        %1061 = vmatpush1.msra.mxu0 0.0
        %1062 = vmatprep.subr.mxu0 0.0
        %1063 = vmatpush1.msra.mxu0 0.0
        %1064 = vmatprep.subr.mxu0 0.0
        %1065 = vmatpush1.msra.mxu0 0.0
        %1066 = vmatprep.subr.mxu0 0.0
        %1067 = vmatpush1.msra.mxu0 0.0
        %1068 = vmatprep.subr.mxu0 0.0
        %1069 = vmatpush1.msra.mxu0 0.0
        %1070 = vmatprep.subr.mxu0 0.0
        %1071 = vmatpush1.msra.mxu0 0.0
        %1072 = vmatprep.subr.mxu0 0.0
        %1073 = vmatpush1.msra.mxu0 0.0
        %1074 = vmatprep.subr.mxu0 0.0
        %1075 = vmatpush1.msra.mxu0 0.0
        %1076 = vmatprep.subr.mxu0 0.0
        %1077 = vmatpush1.msra.mxu0 0.0
        %1078 = vmatprep.subr.mxu0 0.0
        %1079 = vmatpush1.msra.mxu0 0.0
        %1080 = vmatprep.subr.mxu0 0.0
        %1081 = vmatpush1.msra.mxu0 0.0
        %1082 = vmatprep.subr.mxu0 0.0
        %1083 = vmatpush1.msra.mxu0 0.0
        %1084 = vmatprep.subr.mxu0 0.0
        %1085 = vmatpush1.msra.mxu0 0.0
        %1086 = vmatprep.subr.mxu0 0.0
        %1087 = vmatpush1.msra.mxu0 0.0
        %1088 = vmatprep.subr.mxu0 0.0
        %1089 = vmatpush1.msra.mxu0 0.0
        %1090 = vmatprep.subr.mxu0 0.0
        %1091 = vmatpush1.msra.mxu0 0.0
        %1092 = vmatprep.subr.mxu0 0.0
        %1093 = vmatpush1.msra.mxu0 0.0
        %1094 = vmatprep.subr.mxu0 0.0
        %1095 = vmatpush1.msra.mxu0 0.0
        %1096 = vmatprep.subr.mxu0 0.0
        %1097 = vmatpush1.msra.mxu0 0.0
        %1098 = vmatprep.subr.mxu0 0.0
        %1099 = vmatpush1.msra.mxu0 0.0
        %1100 = vmatprep.subr.mxu0 0.0
        %1101 = vmatpush1.msra.mxu0 0.0
        %1102 = vmatprep.mubr.f32.mxu0 0.0
        %1103 = vmatmul.mubr.f32.gmra.mrb[0].mxu0 %v1036
        %v1104 = vpop.f32.mrb[0].mxu0
        %v1105 = vadd.f32 0.0, %v1104
        %v1106 = vpop.f32.mrb[0].mxu0
        %1107 = vdwg.mxu0
        %v1108 = vlaneseq
        %v1109 = vshrl.u32 %v1108, 7
        %v1110 = vsub.s32 1, %v1109
        %v1111 = vrot.slane %v950, %v1110
        %v1112 = vmul.f32 %v1111, %v946
        %v1113 = vmul.f32 %v1111, %v947
        %v1114 = vmul.f32 %v1112, 1.442695
        %v1115 = vpow.pop %v1114
        %v1116 = vmul.f32 %v1113, 1.442695
        %v1117 = vpow.pop %v1116
        %v1118 = vmul.f32 %v1115, %v1030
        %v1119 = vmul.f32 %v1117, %v1031
        %v1120 = vlaneseq
        %v1121 = vshrl.u32 %v1120, 7
        %v1122 = vsub.s32 1, %v1121
        %v1123 = vrot.slane %v951, %v1122
        %1124 = vset.pattern.permute.xlu0 1
        %1125 = vperm.xlu0 %1124, %v969
        %v1126 = vpop.permute.xlu0 %1125
        %1128 = vset.pattern.permute.xlu0 1
        %1129 = vperm.xlu0 %1128, %v970
        %v1130 = vpop.permute.xlu0 %1129
        %1132 = vset.pattern.permute.xlu0 1
        %1133 = vperm.xlu0 %1132, %v971
        %v1134 = vpop.permute.xlu0 %1133
        %v1136 = vmul.f32 %v1123, %v1126
        %v1137 = vmul.f32 %v1123, %v1130
        %v1138 = vmul.f32 %v1123, %v1134
        %v1142 = vrot.slane %v1136, 2
        %v1143 = vrot.slane %v1137, 2
        %v1144 = vsel %vm1022, %v1142, %v1143
        %v1145 = vrot.slane %v1138, 2
        %v1146 = vsel %vm1022, %v1143, %v1145
        %v1149 = vadd.f32 %v1118, %v1144
        %v1150 = vadd.f32 %v1119, %v1146
        %v1151 = vrot.slane %v952, 1
        %1152 = vrot.lane.b32.xlu0 %v1151, 110
        %v1153 = vpop.permute.xlu0 %1152
        %v1154 = vsel %vm1035, %v1153, 0
        %1156 = vmatprep.subr.mxu0 0.0
        %1157 = vmatpush1.msra.mxu0 %v1149
        %1158 = vmatprep.subr.mxu0 0.0
        %1159 = vmatpush1.msra.mxu0 %v1150
        %1160 = vmatprep.subr.mxu0 0.0
        %1161 = vmatpush1.msra.mxu0 0.0
        %1162 = vmatprep.subr.mxu0 0.0
        %1163 = vmatpush1.msra.mxu0 0.0
        %1164 = vmatprep.subr.mxu0 0.0
        %1165 = vmatpush1.msra.mxu0 0.0
        %1166 = vmatprep.subr.mxu0 0.0
        %1167 = vmatpush1.msra.mxu0 0.0
        %1168 = vmatprep.subr.mxu0 0.0
        %1169 = vmatpush1.msra.mxu0 0.0
        %1170 = vmatprep.subr.mxu0 0.0
        %1171 = vmatpush1.msra.mxu0 0.0
        %1172 = vmatprep.subr.mxu0 0.0
        %1173 = vmatpush1.msra.mxu0 0.0
        %1174 = vmatprep.subr.mxu0 0.0
        %1175 = vmatpush1.msra.mxu0 0.0
        %1176 = vmatprep.subr.mxu0 0.0
        %1177 = vmatpush1.msra.mxu0 0.0
        %1178 = vmatprep.subr.mxu0 0.0
        %1179 = vmatpush1.msra.mxu0 0.0
        %1180 = vmatprep.subr.mxu0 0.0
        %1181 = vmatpush1.msra.mxu0 0.0
        %1182 = vmatprep.subr.mxu0 0.0
        %1183 = vmatpush1.msra.mxu0 0.0
        %1184 = vmatprep.subr.mxu0 0.0
        %1185 = vmatpush1.msra.mxu0 0.0
        %1186 = vmatprep.subr.mxu0 0.0
        %1187 = vmatpush1.msra.mxu0 0.0
        %1188 = vmatprep.subr.mxu0 0.0
        %1189 = vmatpush1.msra.mxu0 0.0
        %1190 = vmatprep.subr.mxu0 0.0
        %1191 = vmatpush1.msra.mxu0 0.0
        %1192 = vmatprep.subr.mxu0 0.0
        %1193 = vmatpush1.msra.mxu0 0.0
        %1194 = vmatprep.subr.mxu0 0.0
        %1195 = vmatpush1.msra.mxu0 0.0
        %1196 = vmatprep.subr.mxu0 0.0
        %1197 = vmatpush1.msra.mxu0 0.0
        %1198 = vmatprep.subr.mxu0 0.0
        %1199 = vmatpush1.msra.mxu0 0.0
        %1200 = vmatprep.subr.mxu0 0.0
        %1201 = vmatpush1.msra.mxu0 0.0
        %1202 = vmatprep.subr.mxu0 0.0
        %1203 = vmatpush1.msra.mxu0 0.0
        %1204 = vmatprep.subr.mxu0 0.0
        %1205 = vmatpush1.msra.mxu0 0.0
        %1206 = vmatprep.subr.mxu0 0.0
        %1207 = vmatpush1.msra.mxu0 0.0
        %1208 = vmatprep.subr.mxu0 0.0
        %1209 = vmatpush1.msra.mxu0 0.0
        %1210 = vmatprep.subr.mxu0 0.0
        %1211 = vmatpush1.msra.mxu0 0.0
        %1212 = vmatprep.subr.mxu0 0.0
        %1213 = vmatpush1.msra.mxu0 0.0
        %1214 = vmatprep.subr.mxu0 0.0
        %1215 = vmatpush1.msra.mxu0 0.0
        %1216 = vmatprep.subr.mxu0 0.0
        %1217 = vmatpush1.msra.mxu0 0.0
        %1218 = vmatprep.subr.mxu0 0.0
        %1219 = vmatpush1.msra.mxu0 0.0
        %1220 = vmatprep.mubr.f32.mxu0 0.0
        %1221 = vmatmul.mubr.f32.gmra.mrb[0].mxu0 %v1154
        %v1222 = vpop.f32.mrb[0].mxu0
        %v1223 = vadd.f32 0.0, %v1222
        %v1224 = vpop.f32.mrb[0].mxu0
        %1225 = vdwg.mxu0
        %v1226 = vlaneseq
        %v1227 = vshrl.u32 %v1226, 7
        %v1228 = vsub.s32 2, %v1227
        %v1229 = vrot.slane %v950, %v1228
        %v1230 = vmul.f32 %v1229, %v946
        %v1231 = vmul.f32 %v1229, %v947
        %v1232 = vmul.f32 %v1230, 1.442695
        %v1233 = vpow.pop %v1232
        %v1234 = vmul.f32 %v1231, 1.442695
        %v1235 = vpow.pop %v1234
        %v1236 = vmul.f32 %v1233, %v1149
        %v1237 = vmul.f32 %v1235, %v1150
        %v1238 = vlaneseq
        %v1239 = vshrl.u32 %v1238, 7
        %v1240 = vsub.s32 2, %v1239
        %v1241 = vrot.slane %v951, %v1240
        %1242 = vset.pattern.permute.xlu0 2
        %1243 = vperm.xlu0 %1242, %v969
        %v1244 = vpop.permute.xlu0 %1243
        %1246 = vset.pattern.permute.xlu0 2
        %1247 = vperm.xlu0 %1246, %v970
        %v1248 = vpop.permute.xlu0 %1247
        %1250 = vset.pattern.permute.xlu0 2
        %1251 = vperm.xlu0 %1250, %v971
        %v1252 = vpop.permute.xlu0 %1251
        %v1254 = vmul.f32 %v1241, %v1244
        %v1255 = vmul.f32 %v1241, %v1248
        %v1256 = vmul.f32 %v1241, %v1252
        %v1260 = vrot.slane %v1254, 2
        %v1261 = vrot.slane %v1255, 2
        %v1262 = vsel %vm1022, %v1260, %v1261
        %v1263 = vrot.slane %v1256, 2
        %v1264 = vsel %vm1022, %v1261, %v1263
        %v1267 = vadd.f32 %v1236, %v1262
        %v1268 = vadd.f32 %v1237, %v1264
        %v1269 = vrot.slane %v952, 2
        %1270 = vrot.lane.b32.xlu0 %v1269, 110
        %v1271 = vpop.permute.xlu0 %1270
        %v1272 = vsel %vm1035, %v1271, 0
        %1274 = vmatprep.subr.mxu0 0.0
        %1275 = vmatpush1.msra.mxu0 %v1267
        %1276 = vmatprep.subr.mxu0 0.0
        %1277 = vmatpush1.msra.mxu0 %v1268
        %1278 = vmatprep.subr.mxu0 0.0
        %1279 = vmatpush1.msra.mxu0 0.0
        %1280 = vmatprep.subr.mxu0 0.0
        %1281 = vmatpush1.msra.mxu0 0.0
        %1282 = vmatprep.subr.mxu0 0.0
        %1283 = vmatpush1.msra.mxu0 0.0
        %1284 = vmatprep.subr.mxu0 0.0
        %1285 = vmatpush1.msra.mxu0 0.0
        %1286 = vmatprep.subr.mxu0 0.0
        %1287 = vmatpush1.msra.mxu0 0.0
        %1288 = vmatprep.subr.mxu0 0.0
        %1289 = vmatpush1.msra.mxu0 0.0
        %1290 = vmatprep.subr.mxu0 0.0
        %1291 = vmatpush1.msra.mxu0 0.0
        %1292 = vmatprep.subr.mxu0 0.0
        %1293 = vmatpush1.msra.mxu0 0.0
        %1294 = vmatprep.subr.mxu0 0.0
        %1295 = vmatpush1.msra.mxu0 0.0
        %1296 = vmatprep.subr.mxu0 0.0
        %1297 = vmatpush1.msra.mxu0 0.0
        %1298 = vmatprep.subr.mxu0 0.0
        %1299 = vmatpush1.msra.mxu0 0.0
        %1300 = vmatprep.subr.mxu0 0.0
        %1301 = vmatpush1.msra.mxu0 0.0
        %1302 = vmatprep.subr.mxu0 0.0
        %1303 = vmatpush1.msra.mxu0 0.0
        %1304 = vmatprep.subr.mxu0 0.0
        %1305 = vmatpush1.msra.mxu0 0.0
        %1306 = vmatprep.subr.mxu0 0.0
        %1307 = vmatpush1.msra.mxu0 0.0
        %1308 = vmatprep.subr.mxu0 0.0
        %1309 = vmatpush1.msra.mxu0 0.0
        %1310 = vmatprep.subr.mxu0 0.0
        %1311 = vmatpush1.msra.mxu0 0.0
        %1312 = vmatprep.subr.mxu0 0.0
        %1313 = vmatpush1.msra.mxu0 0.0
        %1314 = vmatprep.subr.mxu0 0.0
        %1315 = vmatpush1.msra.mxu0 0.0
        %1316 = vmatprep.subr.mxu0 0.0
        %1317 = vmatpush1.msra.mxu0 0.0
        %1318 = vmatprep.subr.mxu0 0.0
        %1319 = vmatpush1.msra.mxu0 0.0
        %1320 = vmatprep.subr.mxu0 0.0
        %1321 = vmatpush1.msra.mxu0 0.0
        %1322 = vmatprep.subr.mxu0 0.0
        %1323 = vmatpush1.msra.mxu0 0.0
        %1324 = vmatprep.subr.mxu0 0.0
        %1325 = vmatpush1.msra.mxu0 0.0
        %1326 = vmatprep.subr.mxu0 0.0
        %1327 = vmatpush1.msra.mxu0 0.0
        %1328 = vmatprep.subr.mxu0 0.0
        %1329 = vmatpush1.msra.mxu0 0.0
        %1330 = vmatprep.subr.mxu0 0.0
        %1331 = vmatpush1.msra.mxu0 0.0
        %1332 = vmatprep.subr.mxu0 0.0
        %1333 = vmatpush1.msra.mxu0 0.0
        %1334 = vmatprep.subr.mxu0 0.0
        %1335 = vmatpush1.msra.mxu0 0.0
        %1336 = vmatprep.subr.mxu0 0.0
        %1337 = vmatpush1.msra.mxu0 0.0
        %1338 = vmatprep.mubr.f32.mxu0 0.0
        %1339 = vmatmul.mubr.f32.gmra.mrb[0].mxu0 %v1272
        %v1340 = vpop.f32.mrb[0].mxu0
        %v1341 = vadd.f32 0.0, %v1340
        %v1342 = vpop.f32.mrb[0].mxu0
        %1343 = vdwg.mxu0
        %v1344 = vlaneseq
        %v1345 = vshrl.u32 %v1344, 7
        %v1346 = vsub.s32 3, %v1345
        %v1347 = vrot.slane %v950, %v1346
        %v1348 = vmul.f32 %v1347, %v946
        %v1349 = vmul.f32 %v1347, %v947
        %v1350 = vmul.f32 %v1348, 1.442695
        %v1351 = vpow.pop %v1350
        %v1352 = vmul.f32 %v1349, 1.442695
        %v1353 = vpow.pop %v1352
        %v1354 = vmul.f32 %v1351, %v1267
        %v1355 = vmul.f32 %v1353, %v1268
        %v1356 = vlaneseq
        %v1357 = vshrl.u32 %v1356, 7
        %v1358 = vsub.s32 3, %v1357
        %v1359 = vrot.slane %v951, %v1358
        %1360 = vset.pattern.permute.xlu0 3
        %1361 = vperm.xlu0 %1360, %v969
        %v1362 = vpop.permute.xlu0 %1361
        %1364 = vset.pattern.permute.xlu0 3
        %1365 = vperm.xlu0 %1364, %v970
        %v1366 = vpop.permute.xlu0 %1365
        %1368 = vset.pattern.permute.xlu0 3
        %1369 = vperm.xlu0 %1368, %v971
        %v1370 = vpop.permute.xlu0 %1369
        %v1372 = vmul.f32 %v1359, %v1362
        %v1373 = vmul.f32 %v1359, %v1366
        %v1374 = vmul.f32 %v1359, %v1370
        %v1378 = vrot.slane %v1372, 2
        %v1379 = vrot.slane %v1373, 2
        %v1380 = vsel %vm1022, %v1378, %v1379
        %v1381 = vrot.slane %v1374, 2
        %v1382 = vsel %vm1022, %v1379, %v1381
        %v1385 = vadd.f32 %v1354, %v1380
        %v1386 = vadd.f32 %v1355, %v1382
        %v1387 = vrot.slane %v952, 3
        %1388 = vrot.lane.b32.xlu0 %v1387, 110
        %v1389 = vpop.permute.xlu0 %1388
        %v1390 = vsel %vm1035, %v1389, 0
        %1392 = vmatprep.subr.mxu0 0.0
        %1393 = vmatpush1.msra.mxu0 %v1385
        %1394 = vmatprep.subr.mxu0 0.0
        %1395 = vmatpush1.msra.mxu0 %v1386
        %1396 = vmatprep.subr.mxu0 0.0
        %1397 = vmatpush1.msra.mxu0 0.0
        %1398 = vmatprep.subr.mxu0 0.0
        %1399 = vmatpush1.msra.mxu0 0.0
        %1400 = vmatprep.subr.mxu0 0.0
        %1401 = vmatpush1.msra.mxu0 0.0
        %1402 = vmatprep.subr.mxu0 0.0
        %1403 = vmatpush1.msra.mxu0 0.0
        %1404 = vmatprep.subr.mxu0 0.0
        %1405 = vmatpush1.msra.mxu0 0.0
        %1406 = vmatprep.subr.mxu0 0.0
        %1407 = vmatpush1.msra.mxu0 0.0
        %1408 = vmatprep.subr.mxu0 0.0
        %1409 = vmatpush1.msra.mxu0 0.0
        %1410 = vmatprep.subr.mxu0 0.0
        %1411 = vmatpush1.msra.mxu0 0.0
        %1412 = vmatprep.subr.mxu0 0.0
        %1413 = vmatpush1.msra.mxu0 0.0
        %1414 = vmatprep.subr.mxu0 0.0
        %1415 = vmatpush1.msra.mxu0 0.0
        %1416 = vmatprep.subr.mxu0 0.0
        %1417 = vmatpush1.msra.mxu0 0.0
        %1418 = vmatprep.subr.mxu0 0.0
        %1419 = vmatpush1.msra.mxu0 0.0
        %1420 = vmatprep.subr.mxu0 0.0
        %1421 = vmatpush1.msra.mxu0 0.0
        %1422 = vmatprep.subr.mxu0 0.0
        %1423 = vmatpush1.msra.mxu0 0.0
        %1424 = vmatprep.subr.mxu0 0.0
        %1425 = vmatpush1.msra.mxu0 0.0
        %1426 = vmatprep.subr.mxu0 0.0
        %1427 = vmatpush1.msra.mxu0 0.0
        %1428 = vmatprep.subr.mxu0 0.0
        %1429 = vmatpush1.msra.mxu0 0.0
        %1430 = vmatprep.subr.mxu0 0.0
        %1431 = vmatpush1.msra.mxu0 0.0
        %1432 = vmatprep.subr.mxu0 0.0
        %1433 = vmatpush1.msra.mxu0 0.0
        %1434 = vmatprep.subr.mxu0 0.0
        %1435 = vmatpush1.msra.mxu0 0.0
        %1436 = vmatprep.subr.mxu0 0.0
        %1437 = vmatpush1.msra.mxu0 0.0
        %1438 = vmatprep.subr.mxu0 0.0
        %1439 = vmatpush1.msra.mxu0 0.0
        %1440 = vmatprep.subr.mxu0 0.0
        %1441 = vmatpush1.msra.mxu0 0.0
        %1442 = vmatprep.subr.mxu0 0.0
        %1443 = vmatpush1.msra.mxu0 0.0
        %1444 = vmatprep.subr.mxu0 0.0
        %1445 = vmatpush1.msra.mxu0 0.0
        %1446 = vmatprep.subr.mxu0 0.0
        %1447 = vmatpush1.msra.mxu0 0.0
        %1448 = vmatprep.subr.mxu0 0.0
        %1449 = vmatpush1.msra.mxu0 0.0
        %1450 = vmatprep.subr.mxu0 0.0
        %1451 = vmatpush1.msra.mxu0 0.0
        %1452 = vmatprep.subr.mxu0 0.0
        %1453 = vmatpush1.msra.mxu0 0.0
        %1454 = vmatprep.subr.mxu0 0.0
        %1455 = vmatpush1.msra.mxu0 0.0
        %1456 = vmatprep.mubr.f32.mxu0 0.0
        %1457 = vmatmul.mubr.f32.gmra.mrb[0].mxu0 %v1390
        %v1458 = vpop.f32.mrb[0].mxu0
        %v1459 = vadd.f32 0.0, %v1458
        %v1460 = vpop.f32.mrb[0].mxu0
        %1461 = vdwg.mxu0
        %v1462 = vlaneseq
        %v1463 = vshrl.u32 %v1462, 7
        %v1464 = vsub.s32 4, %v1463
        %v1465 = vrot.slane %v950, %v1464
        %v1466 = vmul.f32 %v1465, %v946
        %v1467 = vmul.f32 %v1465, %v947
        %v1468 = vmul.f32 %v1466, 1.442695
        %v1469 = vpow.pop %v1468
        %v1470 = vmul.f32 %v1467, 1.442695
        %v1471 = vpow.pop %v1470
        %v1472 = vmul.f32 %v1469, %v1385
        %v1473 = vmul.f32 %v1471, %v1386
        %v1474 = vlaneseq
        %v1475 = vshrl.u32 %v1474, 7
        %v1476 = vsub.s32 4, %v1475
        %v1477 = vrot.slane %v951, %v1476
        %1478 = vset.pattern.permute.xlu0 4
        %1479 = vperm.xlu0 %1478, %v969
        %v1480 = vpop.permute.xlu0 %1479
        %1482 = vset.pattern.permute.xlu0 4
        %1483 = vperm.xlu0 %1482, %v970
        %v1484 = vpop.permute.xlu0 %1483
        %1486 = vset.pattern.permute.xlu0 4
        %1487 = vperm.xlu0 %1486, %v971
        %v1488 = vpop.permute.xlu0 %1487
        %v1490 = vmul.f32 %v1477, %v1480
        %v1491 = vmul.f32 %v1477, %v1484
        %v1492 = vmul.f32 %v1477, %v1488
        %v1496 = vrot.slane %v1490, 2
        %v1497 = vrot.slane %v1491, 2
        %v1498 = vsel %vm1022, %v1496, %v1497
        %v1499 = vrot.slane %v1492, 2
        %v1500 = vsel %vm1022, %v1497, %v1499
        %v1503 = vadd.f32 %v1472, %v1498
        %v1504 = vadd.f32 %v1473, %v1500
        %v1505 = vrot.slane %v952, 4
        %1506 = vrot.lane.b32.xlu0 %v1505, 110
        %v1507 = vpop.permute.xlu0 %1506
        %v1508 = vsel %vm1035, %v1507, 0
        %1510 = vmatprep.subr.mxu0 0.0
        %1511 = vmatpush1.msra.mxu0 %v1503
        %1512 = vmatprep.subr.mxu0 0.0
        %1513 = vmatpush1.msra.mxu0 %v1504
        %1514 = vmatprep.subr.mxu0 0.0
        %1515 = vmatpush1.msra.mxu0 0.0
        %1516 = vmatprep.subr.mxu0 0.0
        %1517 = vmatpush1.msra.mxu0 0.0
        %1518 = vmatprep.subr.mxu0 0.0
        %1519 = vmatpush1.msra.mxu0 0.0
        %1520 = vmatprep.subr.mxu0 0.0
        %1521 = vmatpush1.msra.mxu0 0.0
        %1522 = vmatprep.subr.mxu0 0.0
        %1523 = vmatpush1.msra.mxu0 0.0
        %1524 = vmatprep.subr.mxu0 0.0
        %1525 = vmatpush1.msra.mxu0 0.0
        %1526 = vmatprep.subr.mxu0 0.0
        %1527 = vmatpush1.msra.mxu0 0.0
        %1528 = vmatprep.subr.mxu0 0.0
        %1529 = vmatpush1.msra.mxu0 0.0
        %1530 = vmatprep.subr.mxu0 0.0
        %1531 = vmatpush1.msra.mxu0 0.0
        %1532 = vmatprep.subr.mxu0 0.0
        %1533 = vmatpush1.msra.mxu0 0.0
        %1534 = vmatprep.subr.mxu0 0.0
        %1535 = vmatpush1.msra.mxu0 0.0
        %1536 = vmatprep.subr.mxu0 0.0
        %1537 = vmatpush1.msra.mxu0 0.0
        %1538 = vmatprep.subr.mxu0 0.0
        %1539 = vmatpush1.msra.mxu0 0.0
        %1540 = vmatprep.subr.mxu0 0.0
        %1541 = vmatpush1.msra.mxu0 0.0
        %1542 = vmatprep.subr.mxu0 0.0
        %1543 = vmatpush1.msra.mxu0 0.0
        %1544 = vmatprep.subr.mxu0 0.0
        %1545 = vmatpush1.msra.mxu0 0.0
        %1546 = vmatprep.subr.mxu0 0.0
        %1547 = vmatpush1.msra.mxu0 0.0
        %1548 = vmatprep.subr.mxu0 0.0
        %1549 = vmatpush1.msra.mxu0 0.0
        %1550 = vmatprep.subr.mxu0 0.0
        %1551 = vmatpush1.msra.mxu0 0.0
        %1552 = vmatprep.subr.mxu0 0.0
        %1553 = vmatpush1.msra.mxu0 0.0
        %1554 = vmatprep.subr.mxu0 0.0
        %1555 = vmatpush1.msra.mxu0 0.0
        %1556 = vmatprep.subr.mxu0 0.0
        %1557 = vmatpush1.msra.mxu0 0.0
        %1558 = vmatprep.subr.mxu0 0.0
        %1559 = vmatpush1.msra.mxu0 0.0
        %1560 = vmatprep.subr.mxu0 0.0
        %1561 = vmatpush1.msra.mxu0 0.0
        %1562 = vmatprep.subr.mxu0 0.0
        %1563 = vmatpush1.msra.mxu0 0.0
        %1564 = vmatprep.subr.mxu0 0.0
        %1565 = vmatpush1.msra.mxu0 0.0
        %1566 = vmatprep.subr.mxu0 0.0
        %1567 = vmatpush1.msra.mxu0 0.0
        %1568 = vmatprep.subr.mxu0 0.0
        %1569 = vmatpush1.msra.mxu0 0.0
        %1570 = vmatprep.subr.mxu0 0.0
        %1571 = vmatpush1.msra.mxu0 0.0
        %1572 = vmatprep.subr.mxu0 0.0
        %1573 = vmatpush1.msra.mxu0 0.0
        %1574 = vmatprep.mubr.f32.mxu0 0.0
        %1575 = vmatmul.mubr.f32.gmra.mrb[0].mxu0 %v1508
        %v1576 = vpop.f32.mrb[0].mxu0
        %v1577 = vadd.f32 0.0, %v1576
        %v1578 = vpop.f32.mrb[0].mxu0
        %1579 = vdwg.mxu0
        %v1580 = vlaneseq
        %v1581 = vshrl.u32 %v1580, 7
        %v1582 = vsub.s32 5, %v1581
        %v1583 = vrot.slane %v950, %v1582
        %v1584 = vmul.f32 %v1583, %v946
        %v1585 = vmul.f32 %v1583, %v947
        %v1586 = vmul.f32 %v1584, 1.442695
        %v1587 = vpow.pop %v1586
        %v1588 = vmul.f32 %v1585, 1.442695
        %v1589 = vpow.pop %v1588
        %v1590 = vmul.f32 %v1587, %v1503
        %v1591 = vmul.f32 %v1589, %v1504
        %v1592 = vlaneseq
        %v1593 = vshrl.u32 %v1592, 7
        %v1594 = vsub.s32 5, %v1593
        %v1595 = vrot.slane %v951, %v1594
        %1596 = vset.pattern.permute.xlu0 5
        %1597 = vperm.xlu0 %1596, %v969
        %v1598 = vpop.permute.xlu0 %1597
        %1600 = vset.pattern.permute.xlu0 5
        %1601 = vperm.xlu0 %1600, %v970
        %v1602 = vpop.permute.xlu0 %1601
        %1604 = vset.pattern.permute.xlu0 5
        %1605 = vperm.xlu0 %1604, %v971
        %v1606 = vpop.permute.xlu0 %1605
        %v1608 = vmul.f32 %v1595, %v1598
        %v1609 = vmul.f32 %v1595, %v1602
        %v1610 = vmul.f32 %v1595, %v1606
        %v1614 = vrot.slane %v1608, 2
        %v1615 = vrot.slane %v1609, 2
        %v1616 = vsel %vm1022, %v1614, %v1615
        %v1617 = vrot.slane %v1610, 2
        %v1618 = vsel %vm1022, %v1615, %v1617
        %v1621 = vadd.f32 %v1590, %v1616
        %v1622 = vadd.f32 %v1591, %v1618
        %v1623 = vrot.slane %v952, 5
        %1624 = vrot.lane.b32.xlu0 %v1623, 110
        %v1625 = vpop.permute.xlu0 %1624
        %v1626 = vsel %vm1035, %v1625, 0
        %1628 = vmatprep.subr.mxu0 0.0
        %1629 = vmatpush1.msra.mxu0 %v1621
        %1630 = vmatprep.subr.mxu0 0.0
        %1631 = vmatpush1.msra.mxu0 %v1622
        %1632 = vmatprep.subr.mxu0 0.0
        %1633 = vmatpush1.msra.mxu0 0.0
        %1634 = vmatprep.subr.mxu0 0.0
        %1635 = vmatpush1.msra.mxu0 0.0
        %1636 = vmatprep.subr.mxu0 0.0
        %1637 = vmatpush1.msra.mxu0 0.0
        %1638 = vmatprep.subr.mxu0 0.0
        %1639 = vmatpush1.msra.mxu0 0.0
        %1640 = vmatprep.subr.mxu0 0.0
        %1641 = vmatpush1.msra.mxu0 0.0
        %1642 = vmatprep.subr.mxu0 0.0
        %1643 = vmatpush1.msra.mxu0 0.0
        %1644 = vmatprep.subr.mxu0 0.0
        %1645 = vmatpush1.msra.mxu0 0.0
        %1646 = vmatprep.subr.mxu0 0.0
        %1647 = vmatpush1.msra.mxu0 0.0
        %1648 = vmatprep.subr.mxu0 0.0
        %1649 = vmatpush1.msra.mxu0 0.0
        %1650 = vmatprep.subr.mxu0 0.0
        %1651 = vmatpush1.msra.mxu0 0.0
        %1652 = vmatprep.subr.mxu0 0.0
        %1653 = vmatpush1.msra.mxu0 0.0
        %1654 = vmatprep.subr.mxu0 0.0
        %1655 = vmatpush1.msra.mxu0 0.0
        %1656 = vmatprep.subr.mxu0 0.0
        %1657 = vmatpush1.msra.mxu0 0.0
        %1658 = vmatprep.subr.mxu0 0.0
        %1659 = vmatpush1.msra.mxu0 0.0
        %1660 = vmatprep.subr.mxu0 0.0
        %1661 = vmatpush1.msra.mxu0 0.0
        %1662 = vmatprep.subr.mxu0 0.0
        %1663 = vmatpush1.msra.mxu0 0.0
        %1664 = vmatprep.subr.mxu0 0.0
        %1665 = vmatpush1.msra.mxu0 0.0
        %1666 = vmatprep.subr.mxu0 0.0
        %1667 = vmatpush1.msra.mxu0 0.0
        %1668 = vmatprep.subr.mxu0 0.0
        %1669 = vmatpush1.msra.mxu0 0.0
        %1670 = vmatprep.subr.mxu0 0.0
        %1671 = vmatpush1.msra.mxu0 0.0
        %1672 = vmatprep.subr.mxu0 0.0
        %1673 = vmatpush1.msra.mxu0 0.0
        %1674 = vmatprep.subr.mxu0 0.0
        %1675 = vmatpush1.msra.mxu0 0.0
        %1676 = vmatprep.subr.mxu0 0.0
        %1677 = vmatpush1.msra.mxu0 0.0
        %1678 = vmatprep.subr.mxu0 0.0
        %1679 = vmatpush1.msra.mxu0 0.0
        %1680 = vmatprep.subr.mxu0 0.0
        %1681 = vmatpush1.msra.mxu0 0.0
        %1682 = vmatprep.subr.mxu0 0.0
        %1683 = vmatpush1.msra.mxu0 0.0
        %1684 = vmatprep.subr.mxu0 0.0
        %1685 = vmatpush1.msra.mxu0 0.0
        %1686 = vmatprep.subr.mxu0 0.0
        %1687 = vmatpush1.msra.mxu0 0.0
        %1688 = vmatprep.subr.mxu0 0.0
        %1689 = vmatpush1.msra.mxu0 0.0
        %1690 = vmatprep.subr.mxu0 0.0
        %1691 = vmatpush1.msra.mxu0 0.0
        %1692 = vmatprep.mubr.f32.mxu0 0.0
        %1693 = vmatmul.mubr.f32.gmra.mrb[0].mxu0 %v1626
        %v1694 = vpop.f32.mrb[0].mxu0
        %v1695 = vadd.f32 0.0, %v1694
        %v1696 = vpop.f32.mrb[0].mxu0
        %1697 = vdwg.mxu0
        %v1698 = vlaneseq
        %v1699 = vshrl.u32 %v1698, 7
        %v1700 = vsub.s32 6, %v1699
        %v1701 = vrot.slane %v950, %v1700
        %v1702 = vmul.f32 %v1701, %v946
        %v1703 = vmul.f32 %v1701, %v947
        %v1704 = vmul.f32 %v1702, 1.442695
        %v1705 = vpow.pop %v1704
        %v1706 = vmul.f32 %v1703, 1.442695
        %v1707 = vpow.pop %v1706
        %v1708 = vmul.f32 %v1705, %v1621
        %v1709 = vmul.f32 %v1707, %v1622
        %v1710 = vlaneseq
        %v1711 = vshrl.u32 %v1710, 7
        %v1712 = vsub.s32 6, %v1711
        %v1713 = vrot.slane %v951, %v1712
        %1714 = vset.pattern.permute.xlu0 6
        %1715 = vperm.xlu0 %1714, %v969
        %v1716 = vpop.permute.xlu0 %1715
        %1718 = vset.pattern.permute.xlu0 6
        %1719 = vperm.xlu0 %1718, %v970
        %v1720 = vpop.permute.xlu0 %1719
        %1722 = vset.pattern.permute.xlu0 6
        %1723 = vperm.xlu0 %1722, %v971
        %v1724 = vpop.permute.xlu0 %1723
        %v1726 = vmul.f32 %v1713, %v1716
        %v1727 = vmul.f32 %v1713, %v1720
        %v1728 = vmul.f32 %v1713, %v1724
        %v1732 = vrot.slane %v1726, 2
        %v1733 = vrot.slane %v1727, 2
        %v1734 = vsel %vm1022, %v1732, %v1733
        %v1735 = vrot.slane %v1728, 2
        %v1736 = vsel %vm1022, %v1733, %v1735
        %v1739 = vadd.f32 %v1708, %v1734
        %v1740 = vadd.f32 %v1709, %v1736
        %v1741 = vrot.slane %v952, 6
        %1742 = vrot.lane.b32.xlu0 %v1741, 110
        %v1743 = vpop.permute.xlu0 %1742
        %v1744 = vsel %vm1035, %v1743, 0
        %1746 = vmatprep.subr.mxu0 0.0
        %1747 = vmatpush1.msra.mxu0 %v1739
        %1748 = vmatprep.subr.mxu0 0.0
        %1749 = vmatpush1.msra.mxu0 %v1740
        %1750 = vmatprep.subr.mxu0 0.0
        %1751 = vmatpush1.msra.mxu0 0.0
        %1752 = vmatprep.subr.mxu0 0.0
        %1753 = vmatpush1.msra.mxu0 0.0
        %1754 = vmatprep.subr.mxu0 0.0
        %1755 = vmatpush1.msra.mxu0 0.0
        %1756 = vmatprep.subr.mxu0 0.0
        %1757 = vmatpush1.msra.mxu0 0.0
        %1758 = vmatprep.subr.mxu0 0.0
        %1759 = vmatpush1.msra.mxu0 0.0
        %1760 = vmatprep.subr.mxu0 0.0
        %1761 = vmatpush1.msra.mxu0 0.0
        %1762 = vmatprep.subr.mxu0 0.0
        %1763 = vmatpush1.msra.mxu0 0.0
        %1764 = vmatprep.subr.mxu0 0.0
        %1765 = vmatpush1.msra.mxu0 0.0
        %1766 = vmatprep.subr.mxu0 0.0
        %1767 = vmatpush1.msra.mxu0 0.0
        %1768 = vmatprep.subr.mxu0 0.0
        %1769 = vmatpush1.msra.mxu0 0.0
        %1770 = vmatprep.subr.mxu0 0.0
        %1771 = vmatpush1.msra.mxu0 0.0
        %1772 = vmatprep.subr.mxu0 0.0
        %1773 = vmatpush1.msra.mxu0 0.0
        %1774 = vmatprep.subr.mxu0 0.0
        %1775 = vmatpush1.msra.mxu0 0.0
        %1776 = vmatprep.subr.mxu0 0.0
        %1777 = vmatpush1.msra.mxu0 0.0
        %1778 = vmatprep.subr.mxu0 0.0
        %1779 = vmatpush1.msra.mxu0 0.0
        %1780 = vmatprep.subr.mxu0 0.0
        %1781 = vmatpush1.msra.mxu0 0.0
        %1782 = vmatprep.subr.mxu0 0.0
        %1783 = vmatpush1.msra.mxu0 0.0
        %1784 = vmatprep.subr.mxu0 0.0
        %1785 = vmatpush1.msra.mxu0 0.0
        %1786 = vmatprep.subr.mxu0 0.0
        %1787 = vmatpush1.msra.mxu0 0.0
        %1788 = vmatprep.subr.mxu0 0.0
        %1789 = vmatpush1.msra.mxu0 0.0
        %1790 = vmatprep.subr.mxu0 0.0
        %1791 = vmatpush1.msra.mxu0 0.0
        %1792 = vmatprep.subr.mxu0 0.0
        %1793 = vmatpush1.msra.mxu0 0.0
        %1794 = vmatprep.subr.mxu0 0.0
        %1795 = vmatpush1.msra.mxu0 0.0
        %1796 = vmatprep.subr.mxu0 0.0
        %1797 = vmatpush1.msra.mxu0 0.0
        %1798 = vmatprep.subr.mxu0 0.0
        %1799 = vmatpush1.msra.mxu0 0.0
        %1800 = vmatprep.subr.mxu0 0.0
        %1801 = vmatpush1.msra.mxu0 0.0
        %1802 = vmatprep.subr.mxu0 0.0
        %1803 = vmatpush1.msra.mxu0 0.0
        %1804 = vmatprep.subr.mxu0 0.0
        %1805 = vmatpush1.msra.mxu0 0.0
        %1806 = vmatprep.subr.mxu0 0.0
        %1807 = vmatpush1.msra.mxu0 0.0
        %1808 = vmatprep.subr.mxu0 0.0
        %1809 = vmatpush1.msra.mxu0 0.0
        %1810 = vmatprep.mubr.f32.mxu0 0.0
        %1811 = vmatmul.mubr.f32.gmra.mrb[0].mxu0 %v1744
        %v1812 = vpop.f32.mrb[0].mxu0
        %v1813 = vadd.f32 0.0, %v1812
        %v1814 = vpop.f32.mrb[0].mxu0
        %1815 = vdwg.mxu0
        %v1816 = vlaneseq
        %v1817 = vshrl.u32 %v1816, 7
        %v1818 = vsub.s32 7, %v1817
        %v1819 = vrot.slane %v950, %v1818
        %v1820 = vmul.f32 %v1819, %v946
        %v1821 = vmul.f32 %v1819, %v947
        %v1822 = vmul.f32 %v1820, 1.442695
        %v1823 = vpow.pop %v1822
        %v1824 = vmul.f32 %v1821, 1.442695
        %v1825 = vpow.pop %v1824
        %v1826 = vmul.f32 %v1823, %v1739
        %v1827 = vmul.f32 %v1825, %v1740
        %v1828 = vlaneseq
        %v1829 = vshrl.u32 %v1828, 7
        %v1830 = vsub.s32 7, %v1829
        %v1831 = vrot.slane %v951, %v1830
        %1832 = vset.pattern.permute.xlu0 7
        %1833 = vperm.xlu0 %1832, %v969
        %v1834 = vpop.permute.xlu0 %1833
        %1836 = vset.pattern.permute.xlu0 7
        %1837 = vperm.xlu0 %1836, %v970
        %v1838 = vpop.permute.xlu0 %1837
        %1840 = vset.pattern.permute.xlu0 7
        %1841 = vperm.xlu0 %1840, %v971
        %v1842 = vpop.permute.xlu0 %1841
        %v1844 = vmul.f32 %v1831, %v1834
        %v1845 = vmul.f32 %v1831, %v1838
        %v1846 = vmul.f32 %v1831, %v1842
        %v1850 = vrot.slane %v1844, 2
        %v1851 = vrot.slane %v1845, 2
        %v1852 = vsel %vm1022, %v1850, %v1851
        %v1853 = vrot.slane %v1846, 2
        %v1854 = vsel %vm1022, %v1851, %v1853
        %v1857 = vadd.f32 %v1826, %v1852
        %v1858 = vadd.f32 %v1827, %v1854
        %v1859 = vrot.slane %v952, 7
        %1860 = vrot.lane.b32.xlu0 %v1859, 110
        %v1861 = vpop.permute.xlu0 %1860
        %v1862 = vsel %vm1035, %v1861, 0
        %1864 = vmatprep.subr.mxu0 0.0
        %1865 = vmatpush1.msra.mxu0 %v1857
        %1866 = vmatprep.subr.mxu0 0.0
        %1867 = vmatpush1.msra.mxu0 %v1858
        %1868 = vmatprep.subr.mxu0 0.0
        %1869 = vmatpush1.msra.mxu0 0.0
        %1870 = vmatprep.subr.mxu0 0.0
        %1871 = vmatpush1.msra.mxu0 0.0
        %1872 = vmatprep.subr.mxu0 0.0
        %1873 = vmatpush1.msra.mxu0 0.0
        %1874 = vmatprep.subr.mxu0 0.0
        %1875 = vmatpush1.msra.mxu0 0.0
        %1876 = vmatprep.subr.mxu0 0.0
        %1877 = vmatpush1.msra.mxu0 0.0
        %1878 = vmatprep.subr.mxu0 0.0
        %1879 = vmatpush1.msra.mxu0 0.0
        %1880 = vmatprep.subr.mxu0 0.0
        %1881 = vmatpush1.msra.mxu0 0.0
        %1882 = vmatprep.subr.mxu0 0.0
        %1883 = vmatpush1.msra.mxu0 0.0
        %1884 = vmatprep.subr.mxu0 0.0
        %1885 = vmatpush1.msra.mxu0 0.0
        %1886 = vmatprep.subr.mxu0 0.0
        %1887 = vmatpush1.msra.mxu0 0.0
        %1888 = vmatprep.subr.mxu0 0.0
        %1889 = vmatpush1.msra.mxu0 0.0
        %1890 = vmatprep.subr.mxu0 0.0
        %1891 = vmatpush1.msra.mxu0 0.0
        %1892 = vmatprep.subr.mxu0 0.0
        %1893 = vmatpush1.msra.mxu0 0.0
        %1894 = vmatprep.subr.mxu0 0.0
        %1895 = vmatpush1.msra.mxu0 0.0
        %1896 = vmatprep.subr.mxu0 0.0
        %1897 = vmatpush1.msra.mxu0 0.0
        %1898 = vmatprep.subr.mxu0 0.0
        %1899 = vmatpush1.msra.mxu0 0.0
        %1900 = vmatprep.subr.mxu0 0.0
        %1901 = vmatpush1.msra.mxu0 0.0
        %1902 = vmatprep.subr.mxu0 0.0
        %1903 = vmatpush1.msra.mxu0 0.0
        %1904 = vmatprep.subr.mxu0 0.0
        %1905 = vmatpush1.msra.mxu0 0.0
        %1906 = vmatprep.subr.mxu0 0.0
        %1907 = vmatpush1.msra.mxu0 0.0
        %1908 = vmatprep.subr.mxu0 0.0
        %1909 = vmatpush1.msra.mxu0 0.0
        %1910 = vmatprep.subr.mxu0 0.0
        %1911 = vmatpush1.msra.mxu0 0.0
        %1912 = vmatprep.subr.mxu0 0.0
        %1913 = vmatpush1.msra.mxu0 0.0
        %1914 = vmatprep.subr.mxu0 0.0
        %1915 = vmatpush1.msra.mxu0 0.0
        %1916 = vmatprep.subr.mxu0 0.0
        %1917 = vmatpush1.msra.mxu0 0.0
        %1918 = vmatprep.subr.mxu0 0.0
        %1919 = vmatpush1.msra.mxu0 0.0
        %1920 = vmatprep.subr.mxu0 0.0
        %1921 = vmatpush1.msra.mxu0 0.0
        %1922 = vmatprep.subr.mxu0 0.0
        %1923 = vmatpush1.msra.mxu0 0.0
        %1924 = vmatprep.subr.mxu0 0.0
        %1925 = vmatpush1.msra.mxu0 0.0
        %1926 = vmatprep.subr.mxu0 0.0
        %1927 = vmatpush1.msra.mxu0 0.0
        %1928 = vmatprep.mubr.f32.mxu0 0.0
        %1929 = vmatmul.mubr.f32.gmra.mrb[0].mxu0 %v1862
        %v1930 = vpop.f32.mrb[0].mxu0
        %v1931 = vadd.f32 0.0, %v1930
        %v1932 = vpop.f32.mrb[0].mxu0
        %1933 = vdwg.mxu0
        %v1935 = vrot.slane %v1223, 7
        %v1938 = vrot.slane %v1341, 6
        %v1941 = vrot.slane %v1459, 5
        %v1944 = vrot.slane %v1577, 4
        %v1947 = vrot.slane %v1695, 3
        %v1950 = vrot.slane %v1813, 2
        %v1953 = vrot.slane %v1931, 1
        %vm1955 = vcmask 1040384
        %v1956 = vsel %vm1955, %v1105, %v1935
        %v1957 = vsel %vm851, %v1956, %v1938
        %vm1958 = vcmask 1042432
        %v1959 = vsel %vm1958, %v1957, %v1941
        %vm1960 = vcmask 1043456
        %v1961 = vsel %vm1960, %v1959, %v1944
        %vm1962 = vcmask 1044480
        %v1963 = vsel %vm1962, %v1961, %v1947
        %v1964 = vsel %vm1022, %v1963, %v1950
        %vm1965 = vcmask 1046528
        %v1966 = vsel %vm1965, %v1964, %v1953
        %1967 = vst.msk [vmem:[#allocation7] sm:$0xff] %vm571, %v1966
        %1968 = vst.msk [vmem:[#allocation2] sm:$0xff] %vm571, %v1857
        %1969 = vst.msk [vmem:[#allocation2 + $0x8] sm:$0xff] %vm571, %v1858
        %v1970 = vld [vmem:[#allocation7] sm:$0xff]
        %v1971 = vld [vmem:[#allocation19] sm:$0x1]
        %v1973 = vlaneseq
        %v1974 = vshrl.u32 %v1973, 7
        %v1975 = vsub.s32 0, %v1974
        %v1976 = vrot.slane %v1971, %v1975
        %v1978 = vmul.f32 %v1976, %v758
        %v1979 = vadd.f32 %v1970, %v1978
        %v1980 = vxor.u32 %v716, 2147483648
        %v1981 = vmul.f32 %v1980, 1.442695
        %v1982 = vpow.pop %v1981
        %v1983 = vadd.f32 %v1982, 1.0
        %v1984 = vrcp.pop %v1983
        %v1985 = vmul.f32 1.0, %v1984
        %v1986 = vmul.f32 %v716, %v1985
        %v1987 = vmul.f32 %v1979, %v1986
        %v1988 = vld [vmem:[%s10] sm:$0xff]
        %v1989 = vld [vmem:[%s10 + $0x8] sm:$0xff]
        %v1990 = vld [vmem:[%s10 + $0x10] sm:$0xff]
        %v1991 = vld [vmem:[%s10 + $0x18] sm:$0xff]
        %v1993 = vsel %vm571, %v1987, 0
        %1995 = vmatprep.subr.mxu0 0.0
        %1996 = vmatpush1.msra.mxu0 %v1988
        %1997 = vmatprep.subr.mxu0 0.0
        %1998 = vmatpush1.msra.mxu0 %v1989
        %1999 = vmatprep.subr.mxu0 0.0
        %2000 = vmatpush1.msra.mxu0 %v1990
        %2001 = vmatprep.subr.mxu0 0.0
        %2002 = vmatpush1.msra.mxu0 %v1991
        %2003 = vmatprep.subr.mxu0 0.0
        %2004 = vmatpush1.msra.mxu0 0.0
        %2005 = vmatprep.subr.mxu0 0.0
        %2006 = vmatpush1.msra.mxu0 0.0
        %2007 = vmatprep.subr.mxu0 0.0
        %2008 = vmatpush1.msra.mxu0 0.0
        %2009 = vmatprep.subr.mxu0 0.0
        %2010 = vmatpush1.msra.mxu0 0.0
        %2011 = vmatprep.subr.mxu0 0.0
        %2012 = vmatpush1.msra.mxu0 0.0
        %2013 = vmatprep.subr.mxu0 0.0
        %2014 = vmatpush1.msra.mxu0 0.0
        %2015 = vmatprep.subr.mxu0 0.0
        %2016 = vmatpush1.msra.mxu0 0.0
        %2017 = vmatprep.subr.mxu0 0.0
        %2018 = vmatpush1.msra.mxu0 0.0
        %2019 = vmatprep.subr.mxu0 0.0
        %2020 = vmatpush1.msra.mxu0 0.0
        %2021 = vmatprep.subr.mxu0 0.0
        %2022 = vmatpush1.msra.mxu0 0.0
        %2023 = vmatprep.subr.mxu0 0.0
        %2024 = vmatpush1.msra.mxu0 0.0
        %2025 = vmatprep.subr.mxu0 0.0
        %2026 = vmatpush1.msra.mxu0 0.0
        %2027 = vmatprep.subr.mxu0 0.0
        %2028 = vmatpush1.msra.mxu0 0.0
        %2029 = vmatprep.subr.mxu0 0.0
        %2030 = vmatpush1.msra.mxu0 0.0
        %2031 = vmatprep.subr.mxu0 0.0
        %2032 = vmatpush1.msra.mxu0 0.0
        %2033 = vmatprep.subr.mxu0 0.0
        %2034 = vmatpush1.msra.mxu0 0.0
        %2035 = vmatprep.subr.mxu0 0.0
        %2036 = vmatpush1.msra.mxu0 0.0
        %2037 = vmatprep.subr.mxu0 0.0
        %2038 = vmatpush1.msra.mxu0 0.0
        %2039 = vmatprep.subr.mxu0 0.0
        %2040 = vmatpush1.msra.mxu0 0.0
        %2041 = vmatprep.subr.mxu0 0.0
        %2042 = vmatpush1.msra.mxu0 0.0
        %2043 = vmatprep.subr.mxu0 0.0
        %2044 = vmatpush1.msra.mxu0 0.0
        %2045 = vmatprep.subr.mxu0 0.0
        %2046 = vmatpush1.msra.mxu0 0.0
        %2047 = vmatprep.subr.mxu0 0.0
        %2048 = vmatpush1.msra.mxu0 0.0
        %2049 = vmatprep.subr.mxu0 0.0
        %2050 = vmatpush1.msra.mxu0 0.0
        %2051 = vmatprep.subr.mxu0 0.0
        %2052 = vmatpush1.msra.mxu0 0.0
        %2053 = vmatprep.subr.mxu0 0.0
        %2054 = vmatpush1.msra.mxu0 0.0
        %2055 = vmatprep.subr.mxu0 0.0
        %2056 = vmatpush1.msra.mxu0 0.0
        %2057 = vmatprep.subr.mxu0 0.0
        %2058 = vmatpush1.msra.mxu0 0.0
        %2059 = vmatprep.mubr.f32.mxu0 0.0
        %2060 = vmatmul.mubr.f32.gmra.mrb[0].mxu0 %v1993
        %v2061 = vpop.f32.mrb[0].mxu0
        %v2062 = vadd.f32 0.0, %v2061
        %v2063 = vpop.f32.mrb[0].mxu0
        %2064 = vdwg.mxu0
        %v2065 = vsel %vm571, %v2062, 0.0
        %2066 = vadd.xlane.f32.xlu0 %v2065
        %v2067 = vpop.xlane.xlu0 %2066
        %v2068 = vrcp.pop 32.0
        %v2069 = vmul.f32 %v2067, %v2068
        %v2070 = vsub.f32 %v2062, %v2069
        %v2071 = vmul.f32 %v2070, %v2070
        %v2072 = vsel %vm571, %v2071, 0.0
        %2073 = vadd.xlane.f32.xlu0 %v2072
        %v2074 = vpop.xlane.xlu0 %2073
        %v2075 = vmul.f32 %v2074, %v2068
        %v2076 = vadd.f32 %v2075, 1e-05
        %v2077 = vrsqrt.pop %v2076
        %v2078 = vmul.f32 %v2070, %v2077
        %v2079 = vld [vmem:[%s11] sm:$0x1]
        %v2081 = vlaneseq
        %v2082 = vshrl.u32 %v2081, 7
        %v2083 = vsub.s32 0, %v2082
        %v2084 = vrot.slane %v2079, %v2083
        %v2086 = vmul.f32 %v2078, %v2084
        %v2087 = vld [vmem:[%s12] sm:$0x1]
        %v2089 = vlaneseq
        %v2090 = vshrl.u32 %v2089, 7
        %v2091 = vsub.s32 0, %v2090
        %v2092 = vrot.slane %v2087, %v2091
        %v2094 = vadd.f32 %v2086, %v2092
        %2095 = vst.msk [vmem:[%s556] sm:$0xff] %vm571, %v2094
        %s2096 = sand.u32 %s335, 1
        %s2097 = scalar_lea.sflag [#allocation10], %s2096
        %s2098 = sand.u32 %s335, 1
        %s2099 = smul.addr %s2098, 8
        %s2100 = scalar_lea.vmem [#allocation20], %s2099
        // Predicated region
        $region105: #{tpu_custom_call.1} parent=71 // pred_check
          %p2101 = pneg %p345
        $region106: #{tpu_custom_call.1} parent=71 // pred_check_branch
          %2103 = sbr.rel (%p2101) target = $region108
        $region107: #{tpu_custom_call.1} parent=71 // pred_region
          %s2105 = ssub.s32 128, 128
          %2106 = vsyncadd %s2097, %s2105
          %s2107 = smul.addr %s37, 2
          %s2108 = sadd.s32 %s38, %s2107
          %s2109 = smul.addr %s2108, 128
          %s2110 = scalar_lea.hbm %s13, %s2109
          %s2112 = sshll.u32 %s2100, 4
          %s2113 = int_to_ptr.vmem [resolvable:$true] %s2112
          %2115 = dma.vmem_to_hbm [thread:$0]  %s2113, 128, %s2110, %s2097
        $region108: #{tpu_custom_call.1} parent=71 // pred_fallthru
          _
      $region72: #{tpu_custom_call.1} parent=5 // pred_fallthru
        _
      %p2116 = scmp.le.s32.totalorder 2, %s28
      // Predicated region
      $region109: #{tpu_custom_call.1} parent=5 // pred_check
        %p2117 = pneg %p2116
      $region110: #{tpu_custom_call.1} parent=5 // pred_check_branch
        %2119 = sbr.rel (%p2117) target = $region112
      $region111: #{tpu_custom_call.1} parent=5 // pred_region
        %s2120 = ssub.s32 %s28, 2
        // Predicated region
        $region113: #{tpu_custom_call.1} parent=111 // pred_check
          %p2121 = pneg %p351
        $region114: #{tpu_custom_call.1} parent=111 // pred_check_branch
          %2123 = sbr.rel (%p2121) target = $region116
        $region115: #{tpu_custom_call.1} parent=111 // pred_region
          %s2124 = sand.u32 %s336, 1
          %s2125 = scalar_lea.sflag [#allocation10], %s2124
          %s2126 = sand.u32 %s336, 1
          %s2127 = smul.addr %s2126, 8
          %s2128 = scalar_lea.vmem [#allocation20], %s2127
          %2129 = dma.done %s2125, 128
        $region116: #{tpu_custom_call.1} parent=111 // pred_fallthru
          _
      $region112: #{tpu_custom_call.1} parent=5 // pred_fallthru
        _
    $region6: #{tpu_custom_call.1} parent=1 // loop_footer
      %s32 = sadd.s32 1, %s28
    $region7: #{tpu_custom_call.1} parent=1 // loop_footer_branch
      %27 = sbr.rel target = $region3
    $region8: #{tpu_custom_call.1} parent=1 // loop_exit
      _
    %2130 = vsyncpa [#allocation9], 1
    %s2131 = scalar_lea.sflag [#allocation9], 1
    %2132 = vsyncpa %s2131, 1
    %2133 = vsyncpa [#allocation12], 1
    %2134 = vsyncpa [#allocation15], 1
    %2135 = vsyncpa [#allocation18], 1
    %2136 = vsyncpa [#allocation10], 1
    %s2137 = scalar_lea.sflag [#allocation10], 1
    %2138 = vsyncpa %s2137, 1

</llo_original>
